<compile_context>
chip_gen: v7x
topology: tpu7x:2x2x1
jax: 0.10.0
libtpu: 0.0.40
codegen_flags: <defaults>
</compile_context>

<pallas_src>
import jax
import jax.numpy as jnp
from jax.experimental import pallas as pl
from jax.experimental.pallas import tpu as pltpu


def _round_up(x, m):
    return ((x + m - 1) // m) * m


def _mlp_kernel(x_ref, w1_ref, b1_ref, w2_ref, b2_ref, w3_ref, b3_ref,
                w4_ref, b4_ref, o_ref):
    # f32 -> bf16 cast fused into the kernel (no separate XLA pass over x).
    h = x_ref[...].astype(jnp.bfloat16)
    # fc1 + relu (bf16 MXU matmul, f32 accumulate, f32 bias/ReLU, bf16 downcast)
    h = jnp.dot(h, w1_ref[...], preferred_element_type=jnp.float32)
    h = jnp.maximum(h + b1_ref[...], 0.0).astype(jnp.bfloat16)
    # fc2 + relu
    h = jnp.dot(h, w2_ref[...], preferred_element_type=jnp.float32)
    h = jnp.maximum(h + b2_ref[...], 0.0).astype(jnp.bfloat16)
    # fc3 + relu
    h = jnp.dot(h, w3_ref[...], preferred_element_type=jnp.float32)
    h = jnp.maximum(h + b3_ref[...], 0.0).astype(jnp.bfloat16)
    # fc4 (no activation; lane-padded to 128 output columns, stored bf16)
    h = jnp.dot(h, w4_ref[...], preferred_element_type=jnp.float32)
    o_ref[...] = (h + b4_ref[...]).astype(o_ref.dtype)


def prepare_params(params, *, lane_pad=128):
    """One-time parameter prep (hoisted out of the forward path).

    Returns bf16 weights stored (in, out), f32 row-vector biases, and the
    final layer zero-padded to a full 128-lane output slab.
    """
    out_dim = params["w4"].shape[1]
    out_pad = max(lane_pad, _round_up(out_dim, lane_pad))
    prep = {"out_dim": out_dim, "out_pad": out_pad}
    for l in range(1, 5):
        w = params[f"w{l}"].astype(jnp.bfloat16)
        b = params[f"b{l}"].reshape(1, -1).astype(jnp.float32)
        if l == 4 and out_pad != out_dim:
            w = jnp.pad(w, ((0, 0), (0, out_pad - out_dim)))
            b = jnp.pad(b, ((0, 0), (0, out_pad - out_dim)))
        prep[f"w{l}"] = w
        prep[f"b{l}"] = b
    return prep


def particle_detector_forward(x, prep, *, batch_tile=1024, vmem_limit_bytes=None):
    """x: (B, input_dim) float32 (cast to bf16 inside the kernel).
    prep: output of prepare_params(params).

    batch_tile: rows per grid step. Default 1024 amortizes per-step overhead
    and keeps per-tile VMEM ~10-15 MiB. v5e/v6e callers may raise to 2048 (the
    wrapper then raises vmem_limit_bytes to 64 MiB); keep <= 1024 on v7x.
    """
    B, input_dim = x.shape
    w1, b1 = prep["w1"], prep["b1"]
    w2, b2 = prep["w2"], prep["b2"]
    w3, b3 = prep["w3"], prep["b3"]
    w4, b4 = prep["w4"], prep["b4"]
    out_dim, out_pad = prep["out_dim"], prep["out_pad"]
    h1, h2, h3 = w1.shape[1], w2.shape[1], w3.shape[1]

    # --- batch tiling: no jnp.pad copy of x; partial last tile via cdiv grid ---
    tb = int(batch_tile)
    if tb >= B:
        tb = B                       # single tile == full batch dim (always legal)
    else:
        tb = max(8, (tb // 8) * 8)   # tiled path needs tb % 8 == 0
        tb = min(tb, B)
    # v7x has two TensorCores: make sure a big batch yields >= 2 "parallel"
    # grid steps so both cores get work.
    if B > 256 and pl.cdiv(B, tb) < 2:
        tb = _round_up(pl.cdiv(B, 2), 8)
    num_steps = pl.cdiv(B, tb)
    # Out-of-bounds rows of the last partial tile read/write garbage, but every
    # matmul output row depends only on its own input row and the wrapper
    # slices back to [:B], so this is safe. Do not reduce over the raw output.

    if vmem_limit_bytes is None:
        vmem_limit_bytes = (64 if tb > 1024 else 32) * 1024 * 1024

    # Weights/biases: full-array blocks with a constant index_map -> DMA'd once,
    # then VMEM-resident for every batch tile (no re-fetch across grid steps).
    def full(shape):
        return pl.BlockSpec(shape, lambda i: (0,) * len(shape))

    grid_spec = pltpu.PrefetchScalarGridSpec(
        num_scalar_prefetch=0,
        grid=(num_steps,),
        in_specs=[
            pl.BlockSpec((tb, input_dim), lambda i: (i, 0)),
            full(w1.shape), full(b1.shape),
            full(w2.shape), full(b2.shape),
            full(w3.shape), full(b3.shape),
            full(w4.shape), full(b4.shape),
        ],
        out_specs=pl.BlockSpec((tb, out_pad), lambda i: (i, 0)),
    )

    flops = 2 * B * (input_dim * h1 + h1 * h2 + h2 * h3 + h3 * out_pad)
    bytes_accessed = (
        x.size * 4                                            # f32 x read
        + (w1.size + w2.size + w3.size + w4.size) * 2         # bf16 weights
        + (b1.size + b2.size + b3.size + b4.size) * 4         # f32 biases
        + B * out_pad * 2                                     # bf16 padded output
    )

    out = pl.pallas_call(
        _mlp_kernel,
        out_shape=jax.ShapeDtypeStruct((B, out_pad), jnp.bfloat16),
        grid_spec=grid_spec,
        compiler_params=pltpu.CompilerParams(
            dimension_semantics=("parallel",),
            vmem_limit_bytes=vmem_limit_bytes,
        ),
        cost_estimate=pl.CostEstimate(
            flops=flops, transcendentals=0, bytes_accessed=bytes_accessed),
    )(x.astype(jnp.float32), w1, b1, w2, b2, w3, b3, w4, b4)

    # Strip lane padding; upcast the real logit columns to f32.
    return out[:B, :out_dim].astype(jnp.float32)


def init_params(key, input_dim=768, output_dim=2):
    dims = [input_dim, 512, 256, 128, output_dim]
    params = {}
    for layer in range(4):
        fan_in, fan_out = dims[layer], dims[layer + 1]
        key, kw, kb = jax.random.split(key, 3)
        bound = 1.0 / jnp.sqrt(fan_in)
        # Stored as (in, out); equivalent to PyTorch Linear weight (out, in) transposed.
        params[f"w{layer+1}"] = jax.random.uniform(
            kw, (fan_in, fan_out), jnp.float32, -bound, bound)
        params[f"b{layer+1}"] = jax.random.uniform(
            kb, (1, fan_out), jnp.float32, -bound, bound)
    return params


def reference_forward(x, params, *, match_kernel_precision=True):
    """Pure-JAX reference. If match_kernel_precision, mimic the kernel's
    bf16-input / f32-accumulate numerics so the comparison can be tight."""
    def dense(h, w, b, relu):
        if match_kernel_precision:
            h = h.astype(jnp.bfloat16)
            w = w.astype(jnp.bfloat16)
        y = jnp.dot(h, w, preferred_element_type=jnp.float32) + b
        return jnp.maximum(y, 0.0) if relu else y

    h = dense(x, params["w1"], params["b1"], True)
    h = dense(h, params["w2"], params["b2"], True)
    h = dense(h, params["w3"], params["b3"], True)
    return dense(h, params["w4"], params["b4"], False)


if __name__ == "__main__":
    key = jax.random.PRNGKey(0)
    kp, kx = jax.random.split(key)
    input_dim, output_dim, batch = 768, 2, 8

    params = init_params(kp, input_dim, output_dim)
    prep = prepare_params(params)                 # one-time prep, outside forward
    x = jax.random.normal(kx, (batch, input_dim), jnp.float32)

    out = particle_detector_forward(x, prep)
    out = jax.block_until_ready(out)
    assert out.shape == (batch, output_dim)

    # Check vs a reference using the same bf16-input / f32-accumulate path
    # (tolerance loosened slightly because the kernel output is stored in bf16).
    ref_mixed = reference_forward(x, params, match_kernel_precision=True)
    assert jnp.allclose(out, ref_mixed, atol=1e-2, rtol=1e-2), \
        "mismatch vs mixed-precision reference"

    # Loose sanity check vs the pure-f32 reference.
    ref_f32 = reference_forward(x, params, match_kernel_precision=False)
    assert jnp.allclose(out, ref_f32, atol=5e-2, rtol=5e-2), \
        "mismatch vs f32 reference"

    print("KERNEL_OK")
</pallas_src>

<mosaic_0001>
module attributes {stable_mosaic.version = 11 : i64} {
  func.func @_mlp_kernel(%arg0: i32, %arg1: memref<8x768xf32, #tpu.memory_space<vmem>>, %arg2: memref<768x512xbf16, #tpu.memory_space<vmem>>, %arg3: memref<1x512xf32, #tpu.memory_space<vmem>>, %arg4: memref<512x256xbf16, #tpu.memory_space<vmem>>, %arg5: memref<1x256xf32, #tpu.memory_space<vmem>>, %arg6: memref<256x128xbf16, #tpu.memory_space<vmem>>, %arg7: memref<1x128xf32, #tpu.memory_space<vmem>>, %arg8: memref<128x128xbf16, #tpu.memory_space<vmem>>, %arg9: memref<1x128xf32, #tpu.memory_space<vmem>>, %arg10: memref<8x128xbf16, #tpu.memory_space<vmem>>) attributes {dimension_semantics = [#tpu.dimension_semantics<parallel>], iteration_bounds = array<i64: 1>, scalar_prefetch = 0 : i64, scratch_operands = 0 : i64, tpu.core_type = #tpu.core_type<tc>, window_params = [{transform_indices = @transform_0, window_bounds = array<i64: 8, 768>}, {pipeline_mode = #tpu.pipeline_mode<synchronous>, transform_indices = @transform_1, window_bounds = array<i64: 768, 512>}, {pipeline_mode = #tpu.pipeline_mode<synchronous>, transform_indices = @transform_2, window_bounds = array<i64: 1, 512>}, {pipeline_mode = #tpu.pipeline_mode<synchronous>, transform_indices = @transform_3, window_bounds = array<i64: 512, 256>}, {pipeline_mode = #tpu.pipeline_mode<synchronous>, transform_indices = @transform_4, window_bounds = array<i64: 1, 256>}, {pipeline_mode = #tpu.pipeline_mode<synchronous>, transform_indices = @transform_5, window_bounds = array<i64: 256, 128>}, {pipeline_mode = #tpu.pipeline_mode<synchronous>, transform_indices = @transform_6, window_bounds = array<i64: 1, 128>}, {pipeline_mode = #tpu.pipeline_mode<synchronous>, transform_indices = @transform_7, window_bounds = array<i64: 128, 128>}, {pipeline_mode = #tpu.pipeline_mode<synchronous>, transform_indices = @transform_8, window_bounds = array<i64: 1, 128>}, {transform_indices = @transform_9, window_bounds = array<i64: 8, 128>}]} {
    %c0 = arith.constant 0 : index
    %c0_0 = arith.constant 0 : index
    %0 = vector.load %arg1[%c0, %c0_0] : memref<8x768xf32, #tpu.memory_space<vmem>>, vector<8x768xf32>
    %1 = arith.truncf %0 : vector<8x768xf32> to vector<8x768xbf16>
    %c0_1 = arith.constant 0 : index
    %c0_2 = arith.constant 0 : index
    %2 = vector.load %arg2[%c0_1, %c0_2] : memref<768x512xbf16, #tpu.memory_space<vmem>>, vector<768x512xbf16>
    %cst = arith.constant dense<0.000000e+00> : vector<8x512xf32>
    %3 = tpu.matmul %1, %2, %cst {dimension_numbers = #tpu.dot_dimension_numbers<[1], [0], [0], [1], [0, 0, 1, 1], [], []>} : vector<8x768xbf16>, vector<768x512xbf16>, vector<8x512xf32> -> vector<8x512xf32>
    %c0_3 = arith.constant 0 : index
    %c0_4 = arith.constant 0 : index
    %4 = vector.load %arg3[%c0_3, %c0_4] : memref<1x512xf32, #tpu.memory_space<vmem>>, vector<1x512xf32>
    %5 = vector.broadcast %4 : vector<1x512xf32> to vector<8x512xf32>
    %6 = arith.addf %3, %5 : vector<8x512xf32>
    %cst_5 = arith.constant 0.000000e+00 : f32
    %7 = vector.broadcast %cst_5 : f32 to vector<8x512xf32>
    %8 = arith.maximumf %6, %7 : vector<8x512xf32>
    %9 = arith.truncf %8 : vector<8x512xf32> to vector<8x512xbf16>
    %c0_6 = arith.constant 0 : index
    %c0_7 = arith.constant 0 : index
    %10 = vector.load %arg4[%c0_6, %c0_7] : memref<512x256xbf16, #tpu.memory_space<vmem>>, vector<512x256xbf16>
    %cst_8 = arith.constant dense<0.000000e+00> : vector<8x256xf32>
    %11 = tpu.matmul %9, %10, %cst_8 {dimension_numbers = #tpu.dot_dimension_numbers<[1], [0], [0], [1], [0, 0, 1, 1], [], []>} : vector<8x512xbf16>, vector<512x256xbf16>, vector<8x256xf32> -> vector<8x256xf32>
    %c0_9 = arith.constant 0 : index
    %c0_10 = arith.constant 0 : index
    %12 = vector.load %arg5[%c0_9, %c0_10] : memref<1x256xf32, #tpu.memory_space<vmem>>, vector<1x256xf32>
    %13 = vector.broadcast %12 : vector<1x256xf32> to vector<8x256xf32>
    %14 = arith.addf %11, %13 : vector<8x256xf32>
    %cst_11 = arith.constant 0.000000e+00 : f32
    %15 = vector.broadcast %cst_11 : f32 to vector<8x256xf32>
    %16 = arith.maximumf %14, %15 : vector<8x256xf32>
    %17 = arith.truncf %16 : vector<8x256xf32> to vector<8x256xbf16>
    %c0_12 = arith.constant 0 : index
    %c0_13 = arith.constant 0 : index
    %18 = vector.load %arg6[%c0_12, %c0_13] : memref<256x128xbf16, #tpu.memory_space<vmem>>, vector<256x128xbf16>
    %cst_14 = arith.constant dense<0.000000e+00> : vector<8x128xf32>
    %19 = tpu.matmul %17, %18, %cst_14 {dimension_numbers = #tpu.dot_dimension_numbers<[1], [0], [0], [1], [0, 0, 1, 1], [], []>} : vector<8x256xbf16>, vector<256x128xbf16>, vector<8x128xf32> -> vector<8x128xf32>
    %c0_15 = arith.constant 0 : index
    %c0_16 = arith.constant 0 : index
    %20 = vector.load %arg7[%c0_15, %c0_16] : memref<1x128xf32, #tpu.memory_space<vmem>>, vector<1x128xf32>
    %21 = vector.broadcast %20 : vector<1x128xf32> to vector<8x128xf32>
    %22 = arith.addf %19, %21 : vector<8x128xf32>
    %cst_17 = arith.constant 0.000000e+00 : f32
    %23 = vector.broadcast %cst_17 : f32 to vector<8x128xf32>
    %24 = arith.maximumf %22, %23 : vector<8x128xf32>
    %25 = arith.truncf %24 : vector<8x128xf32> to vector<8x128xbf16>
    %c0_18 = arith.constant 0 : index
    %c0_19 = arith.constant 0 : index
    %26 = vector.load %arg8[%c0_18, %c0_19] : memref<128x128xbf16, #tpu.memory_space<vmem>>, vector<128x128xbf16>
    %cst_20 = arith.constant dense<0.000000e+00> : vector<8x128xf32>
    %27 = tpu.matmul %25, %26, %cst_20 {dimension_numbers = #tpu.dot_dimension_numbers<[1], [0], [0], [1], [0, 0, 1, 1], [], []>} : vector<8x128xbf16>, vector<128x128xbf16>, vector<8x128xf32> -> vector<8x128xf32>
    %c0_21 = arith.constant 0 : index
    %c0_22 = arith.constant 0 : index
    %28 = vector.load %arg9[%c0_21, %c0_22] : memref<1x128xf32, #tpu.memory_space<vmem>>, vector<1x128xf32>
    %29 = vector.broadcast %28 : vector<1x128xf32> to vector<8x128xf32>
    %30 = arith.addf %27, %29 : vector<8x128xf32>
    %31 = arith.truncf %30 : vector<8x128xf32> to vector<8x128xbf16>
    %c0_23 = arith.constant 0 : index
    %c0_24 = arith.constant 0 : index
    %32 = vector.load %arg10[%c0_23, %c0_24] : memref<8x128xbf16, #tpu.memory_space<vmem>>, vector<8x128xbf16>
    tpu.vector_store %arg10[%c0_23, %c0_24], %31 {strides = array<i32>} : memref<8x128xbf16, #tpu.memory_space<vmem>>, vector<8x128xbf16>,
    return
  }
  func.func @transform_0(%arg0: i32) -> (i32, i32) {
    %c0_i32 = arith.constant 0 : i32
    %c0_i32_0 = arith.constant 0 : i32
    return %arg0, %c0_i32 : i32, i32
  }
  func.func @transform_1(%arg0: i32) -> (i32, i32) {
    %c0_i32 = arith.constant 0 : i32
    %c0_i32_0 = arith.constant 0 : i32
    %c0_i32_1 = arith.constant 0 : i32
    return %c0_i32, %c0_i32_0 : i32, i32
  }
  func.func @transform_2(%arg0: i32) -> (i32, i32) {
    %c0_i32 = arith.constant 0 : i32
    %c0_i32_0 = arith.constant 0 : i32
    %c0_i32_1 = arith.constant 0 : i32
    return %c0_i32, %c0_i32_0 : i32, i32
  }
  func.func @transform_3(%arg0: i32) -> (i32, i32) {
    %c0_i32 = arith.constant 0 : i32
    %c0_i32_0 = arith.constant 0 : i32
    %c0_i32_1 = arith.constant 0 : i32
    return %c0_i32, %c0_i32_0 : i32, i32
  }
  func.func @transform_4(%arg0: i32) -> (i32, i32) {
    %c0_i32 = arith.constant 0 : i32
    %c0_i32_0 = arith.constant 0 : i32
    %c0_i32_1 = arith.constant 0 : i32
    return %c0_i32, %c0_i32_0 : i32, i32
  }
  func.func @transform_5(%arg0: i32) -> (i32, i32) {
    %c0_i32 = arith.constant 0 : i32
    %c0_i32_0 = arith.constant 0 : i32
    %c0_i32_1 = arith.constant 0 : i32
    return %c0_i32, %c0_i32_0 : i32, i32
  }
  func.func @transform_6(%arg0: i32) -> (i32, i32) {
    %c0_i32 = arith.constant 0 : i32
    %c0_i32_0 = arith.constant 0 : i32
    %c0_i32_1 = arith.constant 0 : i32
    return %c0_i32, %c0_i32_0 : i32, i32
  }
  func.func @transform_7(%arg0: i32) -> (i32, i32) {
    %c0_i32 = arith.constant 0 : i32
    %c0_i32_0 = arith.constant 0 : i32
    %c0_i32_1 = arith.constant 0 : i32
    return %c0_i32, %c0_i32_0 : i32, i32
  }
  func.func @transform_8(%arg0: i32) -> (i32, i32) {
    %c0_i32 = arith.constant 0 : i32
    %c0_i32_0 = arith.constant 0 : i32
    %c0_i32_1 = arith.constant 0 : i32
    return %c0_i32, %c0_i32_0 : i32, i32
  }
  func.func @transform_9(%arg0: i32) -> (i32, i32) {
    %c0_i32 = arith.constant 0 : i32
    %c0_i32_0 = arith.constant 0 : i32
    return %arg0, %c0_i32 : i32, i32
  }
}

</mosaic_0001>

<llo_original>
// kernel: tpu_custom_call.1
$region0: #{tpu_custom_call.1}
  #allocation0 [shape = 'u32[]', space=smem, size = 0x4, offset = 0x4, fixed_abs, tag = 'smem constant byte address 0x4 - core index']
  #allocation1 [shape = 'u32[144,128]{1,0:T(1,128)}', space=vmem, size = 0x12000, scoped, tag = 'internal scratch']
  %s0 = inlined_call_operand.hbm [shape: f32[8,768], index: 0, kind: input, shape index: {}]
  %s1 = inlined_call_operand.hbm [shape: bf16[768,512], index: 1, kind: input, shape index: {}]
  %s2 = inlined_call_operand.vmem [shape: f32[1,512], index: 2, kind: input, shape index: {}]
  %s3 = inlined_call_operand.hbm [shape: bf16[512,256], index: 3, kind: input, shape index: {}]
  %s4 = inlined_call_operand.vmem [shape: f32[1,256], index: 4, kind: input, shape index: {}]
  %s5 = inlined_call_operand.hbm [shape: bf16[256,128], index: 5, kind: input, shape index: {}]
  %s6 = inlined_call_operand.vmem [shape: f32[1,128], index: 6, kind: input, shape index: {}]
  %s7 = inlined_call_operand.hbm [shape: bf16[128,128], index: 7, kind: input, shape index: {}]
  %s8 = inlined_call_operand.vmem [shape: f32[1,128], index: 8, kind: input, shape index: {}]
  %s9 = inlined_call_operand.hbm [shape: bf16[8,128], index: 9, kind: output, shape index: {}]
  %s10 = sld [smem:[#allocation0]]
  $region66: #{tpu_custom_call.1} parent=0
    _
  %s12 = ssub.s32 1, %s10
  %s13 = scalar_select 0, %s12, %s10
  $region1: #{tpu_custom_call.1} parent=0
    #allocation2 [shape = 'u8[24576]{0}', space=vmem, size = 0x6000, scoped, tag = 'input window, operand 0, single buffered']
    #allocation3 [shape = 's32[1]{0}', space=sflag, size = 0x4, scoped, tag = 'scoped memory for tpu_custom_call.1']
    #allocation4 [shape = 's32[1]{0}', space=sflag, size = 0x4, scoped, tag = 'scoped memory for tpu_custom_call.1']
    #allocation5 [shape = 'u8[786432]{0}', space=vmem, size = 0xc0000, scoped, tag = 'input window, operand 1, single buffered']
    #allocation6 [shape = 's32[1]{0}', space=sflag, size = 0x4, scoped, tag = 'scoped memory for tpu_custom_call.1']
    #allocation7 [shape = 'u8[262144]{0}', space=vmem, size = 0x40000, scoped, tag = 'input window, operand 3, single buffered']
    #allocation8 [shape = 'u8[65536]{0}', space=vmem, size = 0x10000, scoped, tag = 'input window, operand 5, single buffered']
    #allocation9 [shape = 's32[1]{0}', space=sflag, size = 0x4, scoped, tag = 'scoped memory for tpu_custom_call.1']
    #allocation10 [shape = 'u8[32768]{0}', space=vmem, size = 0x8000, scoped, tag = 'input window, operand 7, single buffered']
    #allocation11 [shape = 'u8[2048]{0}', space=vmem, size = 0x800, scoped, tag = 'output window, operand 0, single buffered']
    %14 = vsyncpa [#allocation3], 0
    %15 = vsyncpa [#allocation6], 0
    %16 = vsyncpa [#allocation9], 0
    %17 = vsyncpa [#allocation4], 0
    // Predicated region
    $region2: #{tpu_custom_call.1} parent=1 // pred_check
      _
    $region3: #{tpu_custom_call.1} parent=1 // pred_check_branch
      %19 = sbr.rel (0) target = $region5
    $region4: #{tpu_custom_call.1} parent=1 // pred_region
      %s21 = ssub.s32 768, 768
      %22 = vsyncadd [#allocation3], %s21
      %s24 = sshll.u32 [#allocation2], 4
      %s25 = int_to_ptr.vmem [resolvable:$true] %s24
      %27 = dma.hbm_to_vmem [thread:$0]  %s0, 768, %s25, [#allocation3]
    $region5: #{tpu_custom_call.1} parent=1 // pred_fallthru
      _
    // Predicated region
    $region6: #{tpu_custom_call.1} parent=1 // pred_check
      _
    $region7: #{tpu_custom_call.1} parent=1 // pred_check_branch
      %29 = sbr.rel (0) target = $region9
    $region8: #{tpu_custom_call.1} parent=1 // pred_region
      %s31 = ssub.s32 24576, 24576
      %32 = vsyncadd [#allocation6], %s31
      %s33 = sshll.u32 [#allocation5], 4
      %s34 = int_to_ptr.vmem [resolvable:$true] %s33
      %39 = dma.hbm_to_vmem [thread:$0]  %s1, 24576, %s34, [#allocation6], 256, 256, 16
    $region9: #{tpu_custom_call.1} parent=1 // pred_fallthru
      _
    // Predicated region
    $region10: #{tpu_custom_call.1} parent=1 // pred_check
      _
    $region11: #{tpu_custom_call.1} parent=1 // pred_check_branch
      %41 = sbr.rel (0) target = $region13
    $region12: #{tpu_custom_call.1} parent=1 // pred_region
      _
    $region13: #{tpu_custom_call.1} parent=1 // pred_fallthru
      _
    // Predicated region
    $region14: #{tpu_custom_call.1} parent=1 // pred_check
      _
    $region15: #{tpu_custom_call.1} parent=1 // pred_check_branch
      %43 = sbr.rel (0) target = $region17
    $region16: #{tpu_custom_call.1} parent=1 // pred_region
      %s45 = ssub.s32 8192, 8192
      %46 = vsyncadd [#allocation6], %s45
      %s47 = sshll.u32 [#allocation7], 4
      %s48 = int_to_ptr.vmem [resolvable:$true] %s47
      %53 = dma.hbm_to_vmem [thread:$0]  %s3, 8192, %s48, [#allocation6], 128, 128, 8
    $region17: #{tpu_custom_call.1} parent=1 // pred_fallthru
      _
    // Predicated region
    $region18: #{tpu_custom_call.1} parent=1 // pred_check
      _
    $region19: #{tpu_custom_call.1} parent=1 // pred_check_branch
      %55 = sbr.rel (0) target = $region21
    $region20: #{tpu_custom_call.1} parent=1 // pred_region
      _
    $region21: #{tpu_custom_call.1} parent=1 // pred_fallthru
      _
    // Predicated region
    $region22: #{tpu_custom_call.1} parent=1 // pred_check
      _
    $region23: #{tpu_custom_call.1} parent=1 // pred_check_branch
      %57 = sbr.rel (0) target = $region25
    $region24: #{tpu_custom_call.1} parent=1 // pred_region
      %s59 = ssub.s32 2048, 2048
      %60 = vsyncadd [#allocation9], %s59
      %s61 = sshll.u32 [#allocation8], 4
      %s62 = int_to_ptr.vmem [resolvable:$true] %s61
      %67 = dma.hbm_to_vmem [thread:$0]  %s5, 2048, %s62, [#allocation9], 64, 64, 4
    $region25: #{tpu_custom_call.1} parent=1 // pred_fallthru
      _
    // Predicated region
    $region26: #{tpu_custom_call.1} parent=1 // pred_check
      _
    $region27: #{tpu_custom_call.1} parent=1 // pred_check_branch
      %69 = sbr.rel (0) target = $region29
    $region28: #{tpu_custom_call.1} parent=1 // pred_region
      _
    $region29: #{tpu_custom_call.1} parent=1 // pred_fallthru
      _
    // Predicated region
    $region30: #{tpu_custom_call.1} parent=1 // pred_check
      _
    $region31: #{tpu_custom_call.1} parent=1 // pred_check_branch
      %71 = sbr.rel (0) target = $region33
    $region32: #{tpu_custom_call.1} parent=1 // pred_region
      %s73 = ssub.s32 1024, 1024
      %74 = vsyncadd [#allocation9], %s73
      %s75 = sshll.u32 [#allocation10], 4
      %s76 = int_to_ptr.vmem [resolvable:$true] %s75
      %81 = dma.hbm_to_vmem [thread:$0]  %s7, 1024, %s76, [#allocation9], 64, 64, 4
    $region33: #{tpu_custom_call.1} parent=1 // pred_fallthru
      _
    // Predicated region
    $region34: #{tpu_custom_call.1} parent=1 // pred_check
      _
    $region35: #{tpu_custom_call.1} parent=1 // pred_check_branch
      %83 = sbr.rel (0) target = $region37
    $region36: #{tpu_custom_call.1} parent=1 // pred_region
      _
    $region37: #{tpu_custom_call.1} parent=1 // pred_fallthru
      _
    // Predicated region
    $region38: #{tpu_custom_call.1} parent=1 // pred_check
      _
    $region39: #{tpu_custom_call.1} parent=1 // pred_check_branch
      %85 = sbr.rel (0) target = $region41
    $region40: #{tpu_custom_call.1} parent=1 // pred_region
      %86 = dma.done [#allocation3], 768
    $region41: #{tpu_custom_call.1} parent=1 // pred_fallthru
      _
    // Predicated region
    $region42: #{tpu_custom_call.1} parent=1 // pred_check
      _
    $region43: #{tpu_custom_call.1} parent=1 // pred_check_branch
      %88 = sbr.rel (0) target = $region45
    $region44: #{tpu_custom_call.1} parent=1 // pred_region
      %89 = dma.done [#allocation6], 24576
    $region45: #{tpu_custom_call.1} parent=1 // pred_fallthru
      _
    // Predicated region
    $region46: #{tpu_custom_call.1} parent=1 // pred_check
      _
    $region47: #{tpu_custom_call.1} parent=1 // pred_check_branch
      %91 = sbr.rel (0) target = $region49
    $region48: #{tpu_custom_call.1} parent=1 // pred_region
      %92 = dma.done [#allocation6], 8192
    $region49: #{tpu_custom_call.1} parent=1 // pred_fallthru
      _
    // Predicated region
    $region50: #{tpu_custom_call.1} parent=1 // pred_check
      _
    $region51: #{tpu_custom_call.1} parent=1 // pred_check_branch
      %94 = sbr.rel (0) target = $region53
    $region52: #{tpu_custom_call.1} parent=1 // pred_region
      %95 = dma.done [#allocation9], 2048
    $region53: #{tpu_custom_call.1} parent=1 // pred_fallthru
      _
    // Predicated region
    $region54: #{tpu_custom_call.1} parent=1 // pred_check
      _
    $region55: #{tpu_custom_call.1} parent=1 // pred_check_branch
      %97 = sbr.rel (0) target = $region57
    $region56: #{tpu_custom_call.1} parent=1 // pred_region
      %98 = dma.done [#allocation9], 1024
    $region57: #{tpu_custom_call.1} parent=1 // pred_fallthru
      _
    %v100 = vld [vmem:[#allocation2] sm:$0xff]
    %v101 = vld [vmem:[#allocation2 + $0x8] sm:$0xff]
    %v102 = vld [vmem:[#allocation2 + $0x10] sm:$0xff]
    %v103 = vld [vmem:[#allocation2 + $0x18] sm:$0xff]
    %v104 = vld [vmem:[#allocation2 + $0x20] sm:$0xff]
    %v105 = vld [vmem:[#allocation2 + $0x28] sm:$0xff]
    %v106 = vpack.c.bf16 %v100, %v100
    %v107 = vpack.c.bf16 %v101, %v101
    %v108 = vpack.c.bf16 %v102, %v102
    %v109 = vpack.c.bf16 %v103, %v103
    %v110 = vpack.c.bf16 %v104, %v104
    %v111 = vpack.c.bf16 %v105, %v105
    %v112 = vld [vmem:[#allocation5] sm:$0xff]
    %v113 = vld [vmem:[#allocation5 + $0x8] sm:$0xff]
    %v114 = vld [vmem:[#allocation5 + $0x10] sm:$0xff]
    %v115 = vld [vmem:[#allocation5 + $0x18] sm:$0xff]
    %v116 = vld [vmem:[#allocation5 + $0x20] sm:$0xff]
    %v117 = vld [vmem:[#allocation5 + $0x28] sm:$0xff]
    %v118 = vld [vmem:[#allocation5 + $0x30] sm:$0xff]
    %v119 = vld [vmem:[#allocation5 + $0x38] sm:$0xff]
    %v120 = vld [vmem:[#allocation5 + $0x40] sm:$0xff]
    %v121 = vld [vmem:[#allocation5 + $0x48] sm:$0xff]
    %v122 = vld [vmem:[#allocation5 + $0x50] sm:$0xff]
    %v123 = vld [vmem:[#allocation5 + $0x58] sm:$0xff]
    %v124 = vld [vmem:[#allocation5 + $0x60] sm:$0xff]
    %v125 = vld [vmem:[#allocation5 + $0x68] sm:$0xff]
    %v126 = vld [vmem:[#allocation5 + $0x70] sm:$0xff]
    %v127 = vld [vmem:[#allocation5 + $0x78] sm:$0xff]
    %v128 = vld [vmem:[#allocation5 + $0x80] sm:$0xff]
    %v129 = vld [vmem:[#allocation5 + $0x88] sm:$0xff]
    %v130 = vld [vmem:[#allocation5 + $0x90] sm:$0xff]
    %v131 = vld [vmem:[#allocation5 + $0x98] sm:$0xff]
    %v132 = vld [vmem:[#allocation5 + $0xa0] sm:$0xff]
    %v133 = vld [vmem:[#allocation5 + $0xa8] sm:$0xff]
    %v134 = vld [vmem:[#allocation5 + $0xb0] sm:$0xff]
    %v135 = vld [vmem:[#allocation5 + $0xb8] sm:$0xff]
    %v136 = vld [vmem:[#allocation5 + $0xc0] sm:$0xff]
    %v137 = vld [vmem:[#allocation5 + $0xc8] sm:$0xff]
    %v138 = vld [vmem:[#allocation5 + $0xd0] sm:$0xff]
    %v139 = vld [vmem:[#allocation5 + $0xd8] sm:$0xff]
    %v140 = vld [vmem:[#allocation5 + $0xe0] sm:$0xff]
    %v141 = vld [vmem:[#allocation5 + $0xe8] sm:$0xff]
    %v142 = vld [vmem:[#allocation5 + $0xf0] sm:$0xff]
    %v143 = vld [vmem:[#allocation5 + $0xf8] sm:$0xff]
    %v144 = vld [vmem:[#allocation5 + $0x100] sm:$0xff]
    %v145 = vld [vmem:[#allocation5 + $0x108] sm:$0xff]
    %v146 = vld [vmem:[#allocation5 + $0x110] sm:$0xff]
    %v147 = vld [vmem:[#allocation5 + $0x118] sm:$0xff]
    %v148 = vld [vmem:[#allocation5 + $0x120] sm:$0xff]
    %v149 = vld [vmem:[#allocation5 + $0x128] sm:$0xff]
    %v150 = vld [vmem:[#allocation5 + $0x130] sm:$0xff]
    %v151 = vld [vmem:[#allocation5 + $0x138] sm:$0xff]
    %v152 = vld [vmem:[#allocation5 + $0x140] sm:$0xff]
    %v153 = vld [vmem:[#allocation5 + $0x148] sm:$0xff]
    %v154 = vld [vmem:[#allocation5 + $0x150] sm:$0xff]
    %v155 = vld [vmem:[#allocation5 + $0x158] sm:$0xff]
    %v156 = vld [vmem:[#allocation5 + $0x160] sm:$0xff]
    %v157 = vld [vmem:[#allocation5 + $0x168] sm:$0xff]
    %v158 = vld [vmem:[#allocation5 + $0x170] sm:$0xff]
    %v159 = vld [vmem:[#allocation5 + $0x178] sm:$0xff]
    %v160 = vld [vmem:[#allocation5 + $0x180] sm:$0xff]
    %v161 = vld [vmem:[#allocation5 + $0x188] sm:$0xff]
    %v162 = vld [vmem:[#allocation5 + $0x190] sm:$0xff]
    %v163 = vld [vmem:[#allocation5 + $0x198] sm:$0xff]
    %v164 = vld [vmem:[#allocation5 + $0x1a0] sm:$0xff]
    %v165 = vld [vmem:[#allocation5 + $0x1a8] sm:$0xff]
    %v166 = vld [vmem:[#allocation5 + $0x1b0] sm:$0xff]
    %v167 = vld [vmem:[#allocation5 + $0x1b8] sm:$0xff]
    %v168 = vld [vmem:[#allocation5 + $0x1c0] sm:$0xff]
    %v169 = vld [vmem:[#allocation5 + $0x1c8] sm:$0xff]
    %v170 = vld [vmem:[#allocation5 + $0x1d0] sm:$0xff]
    %v171 = vld [vmem:[#allocation5 + $0x1d8] sm:$0xff]
    %v172 = vld [vmem:[#allocation5 + $0x1e0] sm:$0xff]
    %v173 = vld [vmem:[#allocation5 + $0x1e8] sm:$0xff]
    %v174 = vld [vmem:[#allocation5 + $0x1f0] sm:$0xff]
    %v175 = vld [vmem:[#allocation5 + $0x1f8] sm:$0xff]
    %v176 = vld [vmem:[#allocation5 + $0x200] sm:$0xff]
    %v177 = vld [vmem:[#allocation5 + $0x208] sm:$0xff]
    %v178 = vld [vmem:[#allocation5 + $0x210] sm:$0xff]
    %v179 = vld [vmem:[#allocation5 + $0x218] sm:$0xff]
    %v180 = vld [vmem:[#allocation5 + $0x220] sm:$0xff]
    %v181 = vld [vmem:[#allocation5 + $0x228] sm:$0xff]
    %v182 = vld [vmem:[#allocation5 + $0x230] sm:$0xff]
    %v183 = vld [vmem:[#allocation5 + $0x238] sm:$0xff]
    %v184 = vld [vmem:[#allocation5 + $0x240] sm:$0xff]
    %v185 = vld [vmem:[#allocation5 + $0x248] sm:$0xff]
    %v186 = vld [vmem:[#allocation5 + $0x250] sm:$0xff]
    %v187 = vld [vmem:[#allocation5 + $0x258] sm:$0xff]
    %v188 = vld [vmem:[#allocation5 + $0x260] sm:$0xff]
    %v189 = vld [vmem:[#allocation5 + $0x268] sm:$0xff]
    %v190 = vld [vmem:[#allocation5 + $0x270] sm:$0xff]
    %v191 = vld [vmem:[#allocation5 + $0x278] sm:$0xff]
    %v192 = vld [vmem:[#allocation5 + $0x280] sm:$0xff]
    %v193 = vld [vmem:[#allocation5 + $0x288] sm:$0xff]
    %v194 = vld [vmem:[#allocation5 + $0x290] sm:$0xff]
    %v195 = vld [vmem:[#allocation5 + $0x298] sm:$0xff]
    %v196 = vld [vmem:[#allocation5 + $0x2a0] sm:$0xff]
    %v197 = vld [vmem:[#allocation5 + $0x2a8] sm:$0xff]
    %v198 = vld [vmem:[#allocation5 + $0x2b0] sm:$0xff]
    %v199 = vld [vmem:[#allocation5 + $0x2b8] sm:$0xff]
    %v200 = vld [vmem:[#allocation5 + $0x2c0] sm:$0xff]
    %v201 = vld [vmem:[#allocation5 + $0x2c8] sm:$0xff]
    %v202 = vld [vmem:[#allocation5 + $0x2d0] sm:$0xff]
    %v203 = vld [vmem:[#allocation5 + $0x2d8] sm:$0xff]
    %v204 = vld [vmem:[#allocation5 + $0x2e0] sm:$0xff]
    %v205 = vld [vmem:[#allocation5 + $0x2e8] sm:$0xff]
    %v206 = vld [vmem:[#allocation5 + $0x2f0] sm:$0xff]
    %v207 = vld [vmem:[#allocation5 + $0x2f8] sm:$0xff]
    %v208 = vld [vmem:[#allocation5 + $0x300] sm:$0xff]
    %v209 = vld [vmem:[#allocation5 + $0x308] sm:$0xff]
    %v210 = vld [vmem:[#allocation5 + $0x310] sm:$0xff]
    %v211 = vld [vmem:[#allocation5 + $0x318] sm:$0xff]
    %v212 = vld [vmem:[#allocation5 + $0x320] sm:$0xff]
    %v213 = vld [vmem:[#allocation5 + $0x328] sm:$0xff]
    %v214 = vld [vmem:[#allocation5 + $0x330] sm:$0xff]
    %v215 = vld [vmem:[#allocation5 + $0x338] sm:$0xff]
    %v216 = vld [vmem:[#allocation5 + $0x340] sm:$0xff]
    %v217 = vld [vmem:[#allocation5 + $0x348] sm:$0xff]
    %v218 = vld [vmem:[#allocation5 + $0x350] sm:$0xff]
    %v219 = vld [vmem:[#allocation5 + $0x358] sm:$0xff]
    %v220 = vld [vmem:[#allocation5 + $0x360] sm:$0xff]
    %v221 = vld [vmem:[#allocation5 + $0x368] sm:$0xff]
    %v222 = vld [vmem:[#allocation5 + $0x370] sm:$0xff]
    %v223 = vld [vmem:[#allocation5 + $0x378] sm:$0xff]
    %v224 = vld [vmem:[#allocation5 + $0x380] sm:$0xff]
    %v225 = vld [vmem:[#allocation5 + $0x388] sm:$0xff]
    %v226 = vld [vmem:[#allocation5 + $0x390] sm:$0xff]
    %v227 = vld [vmem:[#allocation5 + $0x398] sm:$0xff]
    %v228 = vld [vmem:[#allocation5 + $0x3a0] sm:$0xff]
    %v229 = vld [vmem:[#allocation5 + $0x3a8] sm:$0xff]
    %v230 = vld [vmem:[#allocation5 + $0x3b0] sm:$0xff]
    %v231 = vld [vmem:[#allocation5 + $0x3b8] sm:$0xff]
    %v232 = vld [vmem:[#allocation5 + $0x3c0] sm:$0xff]
    %v233 = vld [vmem:[#allocation5 + $0x3c8] sm:$0xff]
    %v234 = vld [vmem:[#allocation5 + $0x3d0] sm:$0xff]
    %v235 = vld [vmem:[#allocation5 + $0x3d8] sm:$0xff]
    %v236 = vld [vmem:[#allocation5 + $0x3e0] sm:$0xff]
    %v237 = vld [vmem:[#allocation5 + $0x3e8] sm:$0xff]
    %v238 = vld [vmem:[#allocation5 + $0x3f0] sm:$0xff]
    %v239 = vld [vmem:[#allocation5 + $0x3f8] sm:$0xff]
    %v240 = vld [vmem:[#allocation5 + $0x400] sm:$0xff]
    %v241 = vld [vmem:[#allocation5 + $0x408] sm:$0xff]
    %v242 = vld [vmem:[#allocation5 + $0x410] sm:$0xff]
    %v243 = vld [vmem:[#allocation5 + $0x418] sm:$0xff]
    %v244 = vld [vmem:[#allocation5 + $0x420] sm:$0xff]
    %v245 = vld [vmem:[#allocation5 + $0x428] sm:$0xff]
    %v246 = vld [vmem:[#allocation5 + $0x430] sm:$0xff]
    %v247 = vld [vmem:[#allocation5 + $0x438] sm:$0xff]
    %v248 = vld [vmem:[#allocation5 + $0x440] sm:$0xff]
    %v249 = vld [vmem:[#allocation5 + $0x448] sm:$0xff]
    %v250 = vld [vmem:[#allocation5 + $0x450] sm:$0xff]
    %v251 = vld [vmem:[#allocation5 + $0x458] sm:$0xff]
    %v252 = vld [vmem:[#allocation5 + $0x460] sm:$0xff]
    %v253 = vld [vmem:[#allocation5 + $0x468] sm:$0xff]
    %v254 = vld [vmem:[#allocation5 + $0x470] sm:$0xff]
    %v255 = vld [vmem:[#allocation5 + $0x478] sm:$0xff]
    %v256 = vld [vmem:[#allocation5 + $0x480] sm:$0xff]
    %v257 = vld [vmem:[#allocation5 + $0x488] sm:$0xff]
    %v258 = vld [vmem:[#allocation5 + $0x490] sm:$0xff]
    %v259 = vld [vmem:[#allocation5 + $0x498] sm:$0xff]
    %v260 = vld [vmem:[#allocation5 + $0x4a0] sm:$0xff]
    %v261 = vld [vmem:[#allocation5 + $0x4a8] sm:$0xff]
    %v262 = vld [vmem:[#allocation5 + $0x4b0] sm:$0xff]
    %v263 = vld [vmem:[#allocation5 + $0x4b8] sm:$0xff]
    %v264 = vld [vmem:[#allocation5 + $0x4c0] sm:$0xff]
    %v265 = vld [vmem:[#allocation5 + $0x4c8] sm:$0xff]
    %v266 = vld [vmem:[#allocation5 + $0x4d0] sm:$0xff]
    %v267 = vld [vmem:[#allocation5 + $0x4d8] sm:$0xff]
    %v268 = vld [vmem:[#allocation5 + $0x4e0] sm:$0xff]
    %v269 = vld [vmem:[#allocation5 + $0x4e8] sm:$0xff]
    %v270 = vld [vmem:[#allocation5 + $0x4f0] sm:$0xff]
    %v271 = vld [vmem:[#allocation5 + $0x4f8] sm:$0xff]
    %v272 = vld [vmem:[#allocation5 + $0x500] sm:$0xff]
    %v273 = vld [vmem:[#allocation5 + $0x508] sm:$0xff]
    %v274 = vld [vmem:[#allocation5 + $0x510] sm:$0xff]
    %v275 = vld [vmem:[#allocation5 + $0x518] sm:$0xff]
    %v276 = vld [vmem:[#allocation5 + $0x520] sm:$0xff]
    %v277 = vld [vmem:[#allocation5 + $0x528] sm:$0xff]
    %v278 = vld [vmem:[#allocation5 + $0x530] sm:$0xff]
    %v279 = vld [vmem:[#allocation5 + $0x538] sm:$0xff]
    %v280 = vld [vmem:[#allocation5 + $0x540] sm:$0xff]
    %v281 = vld [vmem:[#allocation5 + $0x548] sm:$0xff]
    %v282 = vld [vmem:[#allocation5 + $0x550] sm:$0xff]
    %v283 = vld [vmem:[#allocation5 + $0x558] sm:$0xff]
    %v284 = vld [vmem:[#allocation5 + $0x560] sm:$0xff]
    %v285 = vld [vmem:[#allocation5 + $0x568] sm:$0xff]
    %v286 = vld [vmem:[#allocation5 + $0x570] sm:$0xff]
    %v287 = vld [vmem:[#allocation5 + $0x578] sm:$0xff]
    %v288 = vld [vmem:[#allocation5 + $0x580] sm:$0xff]
    %v289 = vld [vmem:[#allocation5 + $0x588] sm:$0xff]
    %v290 = vld [vmem:[#allocation5 + $0x590] sm:$0xff]
    %v291 = vld [vmem:[#allocation5 + $0x598] sm:$0xff]
    %v292 = vld [vmem:[#allocation5 + $0x5a0] sm:$0xff]
    %v293 = vld [vmem:[#allocation5 + $0x5a8] sm:$0xff]
    %v294 = vld [vmem:[#allocation5 + $0x5b0] sm:$0xff]
    %v295 = vld [vmem:[#allocation5 + $0x5b8] sm:$0xff]
    %v296 = vld [vmem:[#allocation5 + $0x5c0] sm:$0xff]
    %v297 = vld [vmem:[#allocation5 + $0x5c8] sm:$0xff]
    %v298 = vld [vmem:[#allocation5 + $0x5d0] sm:$0xff]
    %v299 = vld [vmem:[#allocation5 + $0x5d8] sm:$0xff]
    %v300 = vld [vmem:[#allocation5 + $0x5e0] sm:$0xff]
    %v301 = vld [vmem:[#allocation5 + $0x5e8] sm:$0xff]
    %v302 = vld [vmem:[#allocation5 + $0x5f0] sm:$0xff]
    %v303 = vld [vmem:[#allocation5 + $0x5f8] sm:$0xff]
    %v304 = vld [vmem:[%s2] sm:$0xf]
    %v306 = vlaneseq
    %v307 = vshrl.u32 %v306, 7
    %v308 = vsub.s32 0, %v307
    %v309 = vrot.slane %v304, %v308
    %v310 = vlaneseq
    %v311 = vshrl.u32 %v310, 7
    %v312 = vsub.s32 1, %v311
    %v313 = vrot.slane %v304, %v312
    %v314 = vlaneseq
    %v315 = vshrl.u32 %v314, 7
    %v316 = vsub.s32 2, %v315
    %v317 = vrot.slane %v304, %v316
    %v318 = vlaneseq
    %v319 = vshrl.u32 %v318, 7
    %v320 = vsub.s32 3, %v319
    %v321 = vrot.slane %v304, %v320
    %v518 = vunpack.c.l.b16 %v112
    %v519 = vunpack.c.h.b16 %v112
    %v520 = vunpack.c.l.b16 %v113
    %v521 = vunpack.c.h.b16 %v113
    %v522 = vunpack.c.l.b16 %v114
    %v523 = vunpack.c.h.b16 %v114
    %v524 = vunpack.c.l.b16 %v115
    %v525 = vunpack.c.h.b16 %v115
    %v526 = vunpack.c.l.b16 %v116
    %v527 = vunpack.c.h.b16 %v116
    %v528 = vunpack.c.l.b16 %v117
    %v529 = vunpack.c.h.b16 %v117
    %v530 = vunpack.c.l.b16 %v118
    %v531 = vunpack.c.h.b16 %v118
    %v532 = vunpack.c.l.b16 %v119
    %v533 = vunpack.c.h.b16 %v119
    %v534 = vunpack.c.l.b16 %v120
    %v535 = vunpack.c.h.b16 %v120
    %v536 = vunpack.c.l.b16 %v121
    %v537 = vunpack.c.h.b16 %v121
    %v538 = vunpack.c.l.b16 %v122
    %v539 = vunpack.c.h.b16 %v122
    %v540 = vunpack.c.l.b16 %v123
    %v541 = vunpack.c.h.b16 %v123
    %v542 = vunpack.c.l.b16 %v124
    %v543 = vunpack.c.h.b16 %v124
    %v544 = vunpack.c.l.b16 %v125
    %v545 = vunpack.c.h.b16 %v125
    %v546 = vunpack.c.l.b16 %v126
    %v547 = vunpack.c.h.b16 %v126
    %v548 = vunpack.c.l.b16 %v127
    %v549 = vunpack.c.h.b16 %v127
    %v550 = vunpack.c.l.b16 %v128
    %v551 = vunpack.c.h.b16 %v128
    %v552 = vunpack.c.l.b16 %v129
    %v553 = vunpack.c.h.b16 %v129
    %v554 = vunpack.c.l.b16 %v130
    %v555 = vunpack.c.h.b16 %v130
    %v556 = vunpack.c.l.b16 %v131
    %v557 = vunpack.c.h.b16 %v131
    %v558 = vunpack.c.l.b16 %v132
    %v559 = vunpack.c.h.b16 %v132
    %v560 = vunpack.c.l.b16 %v133
    %v561 = vunpack.c.h.b16 %v133
    %v562 = vunpack.c.l.b16 %v134
    %v563 = vunpack.c.h.b16 %v134
    %v564 = vunpack.c.l.b16 %v135
    %v565 = vunpack.c.h.b16 %v135
    %v566 = vunpack.c.l.b16 %v136
    %v567 = vunpack.c.h.b16 %v136
    %v568 = vunpack.c.l.b16 %v137
    %v569 = vunpack.c.h.b16 %v137
    %v570 = vunpack.c.l.b16 %v138
    %v571 = vunpack.c.h.b16 %v138
    %v572 = vunpack.c.l.b16 %v139
    %v573 = vunpack.c.h.b16 %v139
    %v574 = vunpack.c.l.b16 %v140
    %v575 = vunpack.c.h.b16 %v140
    %v576 = vunpack.c.l.b16 %v141
    %v577 = vunpack.c.h.b16 %v141
    %v578 = vunpack.c.l.b16 %v142
    %v579 = vunpack.c.h.b16 %v142
    %v580 = vunpack.c.l.b16 %v143
    %v581 = vunpack.c.h.b16 %v143
    %v582 = vunpack.c.l.b16 %v144
    %v583 = vunpack.c.h.b16 %v144
    %v584 = vunpack.c.l.b16 %v145
    %v585 = vunpack.c.h.b16 %v145
    %v586 = vunpack.c.l.b16 %v146
    %v587 = vunpack.c.h.b16 %v146
    %v588 = vunpack.c.l.b16 %v147
    %v589 = vunpack.c.h.b16 %v147
    %v590 = vunpack.c.l.b16 %v148
    %v591 = vunpack.c.h.b16 %v148
    %v592 = vunpack.c.l.b16 %v149
    %v593 = vunpack.c.h.b16 %v149
    %v594 = vunpack.c.l.b16 %v150
    %v595 = vunpack.c.h.b16 %v150
    %v596 = vunpack.c.l.b16 %v151
    %v597 = vunpack.c.h.b16 %v151
    %v598 = vunpack.c.l.b16 %v152
    %v599 = vunpack.c.h.b16 %v152
    %v600 = vunpack.c.l.b16 %v153
    %v601 = vunpack.c.h.b16 %v153
    %v602 = vunpack.c.l.b16 %v154
    %v603 = vunpack.c.h.b16 %v154
    %v604 = vunpack.c.l.b16 %v155
    %v605 = vunpack.c.h.b16 %v155
    %v606 = vunpack.c.l.b16 %v156
    %v607 = vunpack.c.h.b16 %v156
    %v608 = vunpack.c.l.b16 %v157
    %v609 = vunpack.c.h.b16 %v157
    %v610 = vunpack.c.l.b16 %v158
    %v611 = vunpack.c.h.b16 %v158
    %v612 = vunpack.c.l.b16 %v159
    %v613 = vunpack.c.h.b16 %v159
    %v614 = vunpack.c.l.b16 %v160
    %v615 = vunpack.c.h.b16 %v160
    %v616 = vunpack.c.l.b16 %v161
    %v617 = vunpack.c.h.b16 %v161
    %v618 = vunpack.c.l.b16 %v162
    %v619 = vunpack.c.h.b16 %v162
    %v620 = vunpack.c.l.b16 %v163
    %v621 = vunpack.c.h.b16 %v163
    %v622 = vunpack.c.l.b16 %v164
    %v623 = vunpack.c.h.b16 %v164
    %v624 = vunpack.c.l.b16 %v165
    %v625 = vunpack.c.h.b16 %v165
    %v626 = vunpack.c.l.b16 %v166
    %v627 = vunpack.c.h.b16 %v166
    %v628 = vunpack.c.l.b16 %v167
    %v629 = vunpack.c.h.b16 %v167
    %v630 = vunpack.c.l.b16 %v168
    %v631 = vunpack.c.h.b16 %v168
    %v632 = vunpack.c.l.b16 %v169
    %v633 = vunpack.c.h.b16 %v169
    %v634 = vunpack.c.l.b16 %v170
    %v635 = vunpack.c.h.b16 %v170
    %v636 = vunpack.c.l.b16 %v171
    %v637 = vunpack.c.h.b16 %v171
    %v638 = vunpack.c.l.b16 %v172
    %v639 = vunpack.c.h.b16 %v172
    %v640 = vunpack.c.l.b16 %v173
    %v641 = vunpack.c.h.b16 %v173
    %v642 = vunpack.c.l.b16 %v174
    %v643 = vunpack.c.h.b16 %v174
    %v644 = vunpack.c.l.b16 %v175
    %v645 = vunpack.c.h.b16 %v175
    %v646 = vunpack.c.l.b16 %v176
    %v647 = vunpack.c.h.b16 %v176
    %v648 = vunpack.c.l.b16 %v177
    %v649 = vunpack.c.h.b16 %v177
    %v650 = vunpack.c.l.b16 %v178
    %v651 = vunpack.c.h.b16 %v178
    %v652 = vunpack.c.l.b16 %v179
    %v653 = vunpack.c.h.b16 %v179
    %v654 = vunpack.c.l.b16 %v180
    %v655 = vunpack.c.h.b16 %v180
    %v656 = vunpack.c.l.b16 %v181
    %v657 = vunpack.c.h.b16 %v181
    %v658 = vunpack.c.l.b16 %v182
    %v659 = vunpack.c.h.b16 %v182
    %v660 = vunpack.c.l.b16 %v183
    %v661 = vunpack.c.h.b16 %v183
    %v662 = vunpack.c.l.b16 %v184
    %v663 = vunpack.c.h.b16 %v184
    %v664 = vunpack.c.l.b16 %v185
    %v665 = vunpack.c.h.b16 %v185
    %v666 = vunpack.c.l.b16 %v186
    %v667 = vunpack.c.h.b16 %v186
    %v668 = vunpack.c.l.b16 %v187
    %v669 = vunpack.c.h.b16 %v187
    %v670 = vunpack.c.l.b16 %v188
    %v671 = vunpack.c.h.b16 %v188
    %v672 = vunpack.c.l.b16 %v189
    %v673 = vunpack.c.h.b16 %v189
    %v674 = vunpack.c.l.b16 %v190
    %v675 = vunpack.c.h.b16 %v190
    %v676 = vunpack.c.l.b16 %v191
    %v677 = vunpack.c.h.b16 %v191
    %v678 = vunpack.c.l.b16 %v192
    %v679 = vunpack.c.h.b16 %v192
    %v680 = vunpack.c.l.b16 %v193
    %v681 = vunpack.c.h.b16 %v193
    %v682 = vunpack.c.l.b16 %v194
    %v683 = vunpack.c.h.b16 %v194
    %v684 = vunpack.c.l.b16 %v195
    %v685 = vunpack.c.h.b16 %v195
    %v686 = vunpack.c.l.b16 %v196
    %v687 = vunpack.c.h.b16 %v196
    %v688 = vunpack.c.l.b16 %v197
    %v689 = vunpack.c.h.b16 %v197
    %v690 = vunpack.c.l.b16 %v198
    %v691 = vunpack.c.h.b16 %v198
    %v692 = vunpack.c.l.b16 %v199
    %v693 = vunpack.c.h.b16 %v199
    %v694 = vunpack.c.l.b16 %v200
    %v695 = vunpack.c.h.b16 %v200
    %v696 = vunpack.c.l.b16 %v201
    %v697 = vunpack.c.h.b16 %v201
    %v698 = vunpack.c.l.b16 %v202
    %v699 = vunpack.c.h.b16 %v202
    %v700 = vunpack.c.l.b16 %v203
    %v701 = vunpack.c.h.b16 %v203
    %v702 = vunpack.c.l.b16 %v204
    %v703 = vunpack.c.h.b16 %v204
    %v704 = vunpack.c.l.b16 %v205
    %v705 = vunpack.c.h.b16 %v205
    %v706 = vunpack.c.l.b16 %v206
    %v707 = vunpack.c.h.b16 %v206
    %v708 = vunpack.c.l.b16 %v207
    %v709 = vunpack.c.h.b16 %v207
    %v710 = vunpack.c.l.b16 %v208
    %v711 = vunpack.c.h.b16 %v208
    %v712 = vunpack.c.l.b16 %v209
    %v713 = vunpack.c.h.b16 %v209
    %v714 = vunpack.c.l.b16 %v210
    %v715 = vunpack.c.h.b16 %v210
    %v716 = vunpack.c.l.b16 %v211
    %v717 = vunpack.c.h.b16 %v211
    %v718 = vunpack.c.l.b16 %v212
    %v719 = vunpack.c.h.b16 %v212
    %v720 = vunpack.c.l.b16 %v213
    %v721 = vunpack.c.h.b16 %v213
    %v722 = vunpack.c.l.b16 %v214
    %v723 = vunpack.c.h.b16 %v214
    %v724 = vunpack.c.l.b16 %v215
    %v725 = vunpack.c.h.b16 %v215
    %v726 = vunpack.c.l.b16 %v216
    %v727 = vunpack.c.h.b16 %v216
    %v728 = vunpack.c.l.b16 %v217
    %v729 = vunpack.c.h.b16 %v217
    %v730 = vunpack.c.l.b16 %v218
    %v731 = vunpack.c.h.b16 %v218
    %v732 = vunpack.c.l.b16 %v219
    %v733 = vunpack.c.h.b16 %v219
    %v734 = vunpack.c.l.b16 %v220
    %v735 = vunpack.c.h.b16 %v220
    %v736 = vunpack.c.l.b16 %v221
    %v737 = vunpack.c.h.b16 %v221
    %v738 = vunpack.c.l.b16 %v222
    %v739 = vunpack.c.h.b16 %v222
    %v740 = vunpack.c.l.b16 %v223
    %v741 = vunpack.c.h.b16 %v223
    %v742 = vunpack.c.l.b16 %v224
    %v743 = vunpack.c.h.b16 %v224
    %v744 = vunpack.c.l.b16 %v225
    %v745 = vunpack.c.h.b16 %v225
    %v746 = vunpack.c.l.b16 %v226
    %v747 = vunpack.c.h.b16 %v226
    %v748 = vunpack.c.l.b16 %v227
    %v749 = vunpack.c.h.b16 %v227
    %v750 = vunpack.c.l.b16 %v228
    %v751 = vunpack.c.h.b16 %v228
    %v752 = vunpack.c.l.b16 %v229
    %v753 = vunpack.c.h.b16 %v229
    %v754 = vunpack.c.l.b16 %v230
    %v755 = vunpack.c.h.b16 %v230
    %v756 = vunpack.c.l.b16 %v231
    %v757 = vunpack.c.h.b16 %v231
    %v758 = vunpack.c.l.b16 %v232
    %v759 = vunpack.c.h.b16 %v232
    %v760 = vunpack.c.l.b16 %v233
    %v761 = vunpack.c.h.b16 %v233
    %v762 = vunpack.c.l.b16 %v234
    %v763 = vunpack.c.h.b16 %v234
    %v764 = vunpack.c.l.b16 %v235
    %v765 = vunpack.c.h.b16 %v235
    %v766 = vunpack.c.l.b16 %v236
    %v767 = vunpack.c.h.b16 %v236
    %v768 = vunpack.c.l.b16 %v237
    %v769 = vunpack.c.h.b16 %v237
    %v770 = vunpack.c.l.b16 %v238
    %v771 = vunpack.c.h.b16 %v238
    %v772 = vunpack.c.l.b16 %v239
    %v773 = vunpack.c.h.b16 %v239
    %v774 = vunpack.c.l.b16 %v240
    %v775 = vunpack.c.h.b16 %v240
    %v776 = vunpack.c.l.b16 %v241
    %v777 = vunpack.c.h.b16 %v241
    %v778 = vunpack.c.l.b16 %v242
    %v779 = vunpack.c.h.b16 %v242
    %v780 = vunpack.c.l.b16 %v243
    %v781 = vunpack.c.h.b16 %v243
    %v782 = vunpack.c.l.b16 %v244
    %v783 = vunpack.c.h.b16 %v244
    %v784 = vunpack.c.l.b16 %v245
    %v785 = vunpack.c.h.b16 %v245
    %v786 = vunpack.c.l.b16 %v246
    %v787 = vunpack.c.h.b16 %v246
    %v788 = vunpack.c.l.b16 %v247
    %v789 = vunpack.c.h.b16 %v247
    %v790 = vunpack.c.l.b16 %v248
    %v791 = vunpack.c.h.b16 %v248
    %v792 = vunpack.c.l.b16 %v249
    %v793 = vunpack.c.h.b16 %v249
    %v794 = vunpack.c.l.b16 %v250
    %v795 = vunpack.c.h.b16 %v250
    %v796 = vunpack.c.l.b16 %v251
    %v797 = vunpack.c.h.b16 %v251
    %v798 = vunpack.c.l.b16 %v252
    %v799 = vunpack.c.h.b16 %v252
    %v800 = vunpack.c.l.b16 %v253
    %v801 = vunpack.c.h.b16 %v253
    %v802 = vunpack.c.l.b16 %v254
    %v803 = vunpack.c.h.b16 %v254
    %v804 = vunpack.c.l.b16 %v255
    %v805 = vunpack.c.h.b16 %v255
    %v806 = vunpack.c.l.b16 %v256
    %v807 = vunpack.c.h.b16 %v256
    %v808 = vunpack.c.l.b16 %v257
    %v809 = vunpack.c.h.b16 %v257
    %v810 = vunpack.c.l.b16 %v258
    %v811 = vunpack.c.h.b16 %v258
    %v812 = vunpack.c.l.b16 %v259
    %v813 = vunpack.c.h.b16 %v259
    %v814 = vunpack.c.l.b16 %v260
    %v815 = vunpack.c.h.b16 %v260
    %v816 = vunpack.c.l.b16 %v261
    %v817 = vunpack.c.h.b16 %v261
    %v818 = vunpack.c.l.b16 %v262
    %v819 = vunpack.c.h.b16 %v262
    %v820 = vunpack.c.l.b16 %v263
    %v821 = vunpack.c.h.b16 %v263
    %v822 = vunpack.c.l.b16 %v264
    %v823 = vunpack.c.h.b16 %v264
    %v824 = vunpack.c.l.b16 %v265
    %v825 = vunpack.c.h.b16 %v265
    %v826 = vunpack.c.l.b16 %v266
    %v827 = vunpack.c.h.b16 %v266
    %v828 = vunpack.c.l.b16 %v267
    %v829 = vunpack.c.h.b16 %v267
    %v830 = vunpack.c.l.b16 %v268
    %v831 = vunpack.c.h.b16 %v268
    %v832 = vunpack.c.l.b16 %v269
    %v833 = vunpack.c.h.b16 %v269
    %v834 = vunpack.c.l.b16 %v270
    %v835 = vunpack.c.h.b16 %v270
    %v836 = vunpack.c.l.b16 %v271
    %v837 = vunpack.c.h.b16 %v271
    %v838 = vunpack.c.l.b16 %v272
    %v839 = vunpack.c.h.b16 %v272
    %v840 = vunpack.c.l.b16 %v273
    %v841 = vunpack.c.h.b16 %v273
    %v842 = vunpack.c.l.b16 %v274
    %v843 = vunpack.c.h.b16 %v274
    %v844 = vunpack.c.l.b16 %v275
    %v845 = vunpack.c.h.b16 %v275
    %v846 = vunpack.c.l.b16 %v276
    %v847 = vunpack.c.h.b16 %v276
    %v848 = vunpack.c.l.b16 %v277
    %v849 = vunpack.c.h.b16 %v277
    %v850 = vunpack.c.l.b16 %v278
    %v851 = vunpack.c.h.b16 %v278
    %v852 = vunpack.c.l.b16 %v279
    %v853 = vunpack.c.h.b16 %v279
    %v854 = vunpack.c.l.b16 %v280
    %v855 = vunpack.c.h.b16 %v280
    %v856 = vunpack.c.l.b16 %v281
    %v857 = vunpack.c.h.b16 %v281
    %v858 = vunpack.c.l.b16 %v282
    %v859 = vunpack.c.h.b16 %v282
    %v860 = vunpack.c.l.b16 %v283
    %v861 = vunpack.c.h.b16 %v283
    %v862 = vunpack.c.l.b16 %v284
    %v863 = vunpack.c.h.b16 %v284
    %v864 = vunpack.c.l.b16 %v285
    %v865 = vunpack.c.h.b16 %v285
    %v866 = vunpack.c.l.b16 %v286
    %v867 = vunpack.c.h.b16 %v286
    %v868 = vunpack.c.l.b16 %v287
    %v869 = vunpack.c.h.b16 %v287
    %v870 = vunpack.c.l.b16 %v288
    %v871 = vunpack.c.h.b16 %v288
    %v872 = vunpack.c.l.b16 %v289
    %v873 = vunpack.c.h.b16 %v289
    %v874 = vunpack.c.l.b16 %v290
    %v875 = vunpack.c.h.b16 %v290
    %v876 = vunpack.c.l.b16 %v291
    %v877 = vunpack.c.h.b16 %v291
    %v878 = vunpack.c.l.b16 %v292
    %v879 = vunpack.c.h.b16 %v292
    %v880 = vunpack.c.l.b16 %v293
    %v881 = vunpack.c.h.b16 %v293
    %v882 = vunpack.c.l.b16 %v294
    %v883 = vunpack.c.h.b16 %v294
    %v884 = vunpack.c.l.b16 %v295
    %v885 = vunpack.c.h.b16 %v295
    %v886 = vunpack.c.l.b16 %v296
    %v887 = vunpack.c.h.b16 %v296
    %v888 = vunpack.c.l.b16 %v297
    %v889 = vunpack.c.h.b16 %v297
    %v890 = vunpack.c.l.b16 %v298
    %v891 = vunpack.c.h.b16 %v298
    %v892 = vunpack.c.l.b16 %v299
    %v893 = vunpack.c.h.b16 %v299
    %v894 = vunpack.c.l.b16 %v300
    %v895 = vunpack.c.h.b16 %v300
    %v896 = vunpack.c.l.b16 %v301
    %v897 = vunpack.c.h.b16 %v301
    %v898 = vunpack.c.l.b16 %v302
    %v899 = vunpack.c.h.b16 %v302
    %v900 = vunpack.c.l.b16 %v303
    %v901 = vunpack.c.h.b16 %v303
    %v902 = vpack.c.b16 %v522, %v518
    %v903 = vpack.c.b16 %v523, %v519
    %v904 = vpack.c.b16 %v524, %v520
    %v905 = vpack.c.b16 %v525, %v521
    %v906 = vpack.c.b16 %v530, %v526
    %v907 = vpack.c.b16 %v531, %v527
    %v908 = vpack.c.b16 %v532, %v528
    %v909 = vpack.c.b16 %v533, %v529
    %v910 = vpack.c.b16 %v538, %v534
    %v911 = vpack.c.b16 %v539, %v535
    %v912 = vpack.c.b16 %v540, %v536
    %v913 = vpack.c.b16 %v541, %v537
    %v914 = vpack.c.b16 %v546, %v542
    %v915 = vpack.c.b16 %v547, %v543
    %v916 = vpack.c.b16 %v548, %v544
    %v917 = vpack.c.b16 %v549, %v545
    %v918 = vpack.c.b16 %v554, %v550
    %v919 = vpack.c.b16 %v555, %v551
    %v920 = vpack.c.b16 %v556, %v552
    %v921 = vpack.c.b16 %v557, %v553
    %v922 = vpack.c.b16 %v562, %v558
    %v923 = vpack.c.b16 %v563, %v559
    %v924 = vpack.c.b16 %v564, %v560
    %v925 = vpack.c.b16 %v565, %v561
    %v926 = vpack.c.b16 %v570, %v566
    %v927 = vpack.c.b16 %v571, %v567
    %v928 = vpack.c.b16 %v572, %v568
    %v929 = vpack.c.b16 %v573, %v569
    %v930 = vpack.c.b16 %v578, %v574
    %v931 = vpack.c.b16 %v579, %v575
    %v932 = vpack.c.b16 %v580, %v576
    %v933 = vpack.c.b16 %v581, %v577
    %v934 = vpack.c.b16 %v586, %v582
    %v935 = vpack.c.b16 %v587, %v583
    %v936 = vpack.c.b16 %v588, %v584
    %v937 = vpack.c.b16 %v589, %v585
    %v938 = vpack.c.b16 %v594, %v590
    %v939 = vpack.c.b16 %v595, %v591
    %v940 = vpack.c.b16 %v596, %v592
    %v941 = vpack.c.b16 %v597, %v593
    %v942 = vpack.c.b16 %v602, %v598
    %v943 = vpack.c.b16 %v603, %v599
    %v944 = vpack.c.b16 %v604, %v600
    %v945 = vpack.c.b16 %v605, %v601
    %v946 = vpack.c.b16 %v610, %v606
    %v947 = vpack.c.b16 %v611, %v607
    %v948 = vpack.c.b16 %v612, %v608
    %v949 = vpack.c.b16 %v613, %v609
    %v950 = vpack.c.b16 %v618, %v614
    %v951 = vpack.c.b16 %v619, %v615
    %v952 = vpack.c.b16 %v620, %v616
    %v953 = vpack.c.b16 %v621, %v617
    %v954 = vpack.c.b16 %v626, %v622
    %v955 = vpack.c.b16 %v627, %v623
    %v956 = vpack.c.b16 %v628, %v624
    %v957 = vpack.c.b16 %v629, %v625
    %v958 = vpack.c.b16 %v634, %v630
    %v959 = vpack.c.b16 %v635, %v631
    %v960 = vpack.c.b16 %v636, %v632
    %v961 = vpack.c.b16 %v637, %v633
    %v962 = vpack.c.b16 %v642, %v638
    %v963 = vpack.c.b16 %v643, %v639
    %v964 = vpack.c.b16 %v644, %v640
    %v965 = vpack.c.b16 %v645, %v641
    %v966 = vpack.c.b16 %v650, %v646
    %v967 = vpack.c.b16 %v651, %v647
    %v968 = vpack.c.b16 %v652, %v648
    %v969 = vpack.c.b16 %v653, %v649
    %v970 = vpack.c.b16 %v658, %v654
    %v971 = vpack.c.b16 %v659, %v655
    %v972 = vpack.c.b16 %v660, %v656
    %v973 = vpack.c.b16 %v661, %v657
    %v974 = vpack.c.b16 %v666, %v662
    %v975 = vpack.c.b16 %v667, %v663
    %v976 = vpack.c.b16 %v668, %v664
    %v977 = vpack.c.b16 %v669, %v665
    %v978 = vpack.c.b16 %v674, %v670
    %v979 = vpack.c.b16 %v675, %v671
    %v980 = vpack.c.b16 %v676, %v672
    %v981 = vpack.c.b16 %v677, %v673
    %v982 = vpack.c.b16 %v682, %v678
    %v983 = vpack.c.b16 %v683, %v679
    %v984 = vpack.c.b16 %v684, %v680
    %v985 = vpack.c.b16 %v685, %v681
    %v986 = vpack.c.b16 %v690, %v686
    %v987 = vpack.c.b16 %v691, %v687
    %v988 = vpack.c.b16 %v692, %v688
    %v989 = vpack.c.b16 %v693, %v689
    %v990 = vpack.c.b16 %v698, %v694
    %v991 = vpack.c.b16 %v699, %v695
    %v992 = vpack.c.b16 %v700, %v696
    %v993 = vpack.c.b16 %v701, %v697
    %v994 = vpack.c.b16 %v706, %v702
    %v995 = vpack.c.b16 %v707, %v703
    %v996 = vpack.c.b16 %v708, %v704
    %v997 = vpack.c.b16 %v709, %v705
    %v998 = vpack.c.b16 %v714, %v710
    %v999 = vpack.c.b16 %v715, %v711
    %v1000 = vpack.c.b16 %v716, %v712
    %v1001 = vpack.c.b16 %v717, %v713
    %v1002 = vpack.c.b16 %v722, %v718
    %v1003 = vpack.c.b16 %v723, %v719
    %v1004 = vpack.c.b16 %v724, %v720
    %v1005 = vpack.c.b16 %v725, %v721
    %v1006 = vpack.c.b16 %v730, %v726
    %v1007 = vpack.c.b16 %v731, %v727
    %v1008 = vpack.c.b16 %v732, %v728
    %v1009 = vpack.c.b16 %v733, %v729
    %v1010 = vpack.c.b16 %v738, %v734
    %v1011 = vpack.c.b16 %v739, %v735
    %v1012 = vpack.c.b16 %v740, %v736
    %v1013 = vpack.c.b16 %v741, %v737
    %v1014 = vpack.c.b16 %v746, %v742
    %v1015 = vpack.c.b16 %v747, %v743
    %v1016 = vpack.c.b16 %v748, %v744
    %v1017 = vpack.c.b16 %v749, %v745
    %v1018 = vpack.c.b16 %v754, %v750
    %v1019 = vpack.c.b16 %v755, %v751
    %v1020 = vpack.c.b16 %v756, %v752
    %v1021 = vpack.c.b16 %v757, %v753
    %v1022 = vpack.c.b16 %v762, %v758
    %v1023 = vpack.c.b16 %v763, %v759
    %v1024 = vpack.c.b16 %v764, %v760
    %v1025 = vpack.c.b16 %v765, %v761
    %v1026 = vpack.c.b16 %v770, %v766
    %v1027 = vpack.c.b16 %v771, %v767
    %v1028 = vpack.c.b16 %v772, %v768
    %v1029 = vpack.c.b16 %v773, %v769
    %v1030 = vpack.c.b16 %v778, %v774
    %v1031 = vpack.c.b16 %v779, %v775
    %v1032 = vpack.c.b16 %v780, %v776
    %v1033 = vpack.c.b16 %v781, %v777
    %v1034 = vpack.c.b16 %v786, %v782
    %v1035 = vpack.c.b16 %v787, %v783
    %v1036 = vpack.c.b16 %v788, %v784
    %v1037 = vpack.c.b16 %v789, %v785
    %v1038 = vpack.c.b16 %v794, %v790
    %v1039 = vpack.c.b16 %v795, %v791
    %v1040 = vpack.c.b16 %v796, %v792
    %v1041 = vpack.c.b16 %v797, %v793
    %v1042 = vpack.c.b16 %v802, %v798
    %v1043 = vpack.c.b16 %v803, %v799
    %v1044 = vpack.c.b16 %v804, %v800
    %v1045 = vpack.c.b16 %v805, %v801
    %v1046 = vpack.c.b16 %v810, %v806
    %v1047 = vpack.c.b16 %v811, %v807
    %v1048 = vpack.c.b16 %v812, %v808
    %v1049 = vpack.c.b16 %v813, %v809
    %v1050 = vpack.c.b16 %v818, %v814
    %v1051 = vpack.c.b16 %v819, %v815
    %v1052 = vpack.c.b16 %v820, %v816
    %v1053 = vpack.c.b16 %v821, %v817
    %v1054 = vpack.c.b16 %v826, %v822
    %v1055 = vpack.c.b16 %v827, %v823
    %v1056 = vpack.c.b16 %v828, %v824
    %v1057 = vpack.c.b16 %v829, %v825
    %v1058 = vpack.c.b16 %v834, %v830
    %v1059 = vpack.c.b16 %v835, %v831
    %v1060 = vpack.c.b16 %v836, %v832
    %v1061 = vpack.c.b16 %v837, %v833
    %v1062 = vpack.c.b16 %v842, %v838
    %v1063 = vpack.c.b16 %v843, %v839
    %v1064 = vpack.c.b16 %v844, %v840
    %v1065 = vpack.c.b16 %v845, %v841
    %v1066 = vpack.c.b16 %v850, %v846
    %v1067 = vpack.c.b16 %v851, %v847
    %v1068 = vpack.c.b16 %v852, %v848
    %v1069 = vpack.c.b16 %v853, %v849
    %v1070 = vpack.c.b16 %v858, %v854
    %v1071 = vpack.c.b16 %v859, %v855
    %v1072 = vpack.c.b16 %v860, %v856
    %v1073 = vpack.c.b16 %v861, %v857
    %v1074 = vpack.c.b16 %v866, %v862
    %v1075 = vpack.c.b16 %v867, %v863
    %v1076 = vpack.c.b16 %v868, %v864
    %v1077 = vpack.c.b16 %v869, %v865
    %v1078 = vpack.c.b16 %v874, %v870
    %v1079 = vpack.c.b16 %v875, %v871
    %v1080 = vpack.c.b16 %v876, %v872
    %v1081 = vpack.c.b16 %v877, %v873
    %v1082 = vpack.c.b16 %v882, %v878
    %v1083 = vpack.c.b16 %v883, %v879
    %v1084 = vpack.c.b16 %v884, %v880
    %v1085 = vpack.c.b16 %v885, %v881
    %v1086 = vpack.c.b16 %v890, %v886
    %v1087 = vpack.c.b16 %v891, %v887
    %v1088 = vpack.c.b16 %v892, %v888
    %v1089 = vpack.c.b16 %v893, %v889
    %v1090 = vpack.c.b16 %v898, %v894
    %v1091 = vpack.c.b16 %v899, %v895
    %v1092 = vpack.c.b16 %v900, %v896
    %v1093 = vpack.c.b16 %v901, %v897
    %1286 = vmatprep.subr.bf16.mxu0 %v903
    %1287 = vmatpush1.bf16.msra.mxu0 %v902
    %1288 = vmatprep.subr.bf16.mxu0 %v907
    %1289 = vmatpush1.bf16.msra.mxu0 %v906
    %1290 = vmatprep.subr.bf16.mxu0 %v911
    %1291 = vmatpush1.bf16.msra.mxu0 %v910
    %1292 = vmatprep.subr.bf16.mxu0 %v915
    %1293 = vmatpush1.bf16.msra.mxu0 %v914
    %1294 = vmatprep.subr.bf16.mxu0 %v919
    %1295 = vmatpush1.bf16.msra.mxu0 %v918
    %1296 = vmatprep.subr.bf16.mxu0 %v923
    %1297 = vmatpush1.bf16.msra.mxu0 %v922
    %1298 = vmatprep.subr.bf16.mxu0 %v927
    %1299 = vmatpush1.bf16.msra.mxu0 %v926
    %1300 = vmatprep.subr.bf16.mxu0 %v931
    %1301 = vmatpush1.bf16.msra.mxu0 %v930
    %1302 = vmatprep.subr.bf16.mxu0 %v935
    %1303 = vmatpush1.bf16.msra.mxu0 %v934
    %1304 = vmatprep.subr.bf16.mxu0 %v939
    %1305 = vmatpush1.bf16.msra.mxu0 %v938
    %1306 = vmatprep.subr.bf16.mxu0 %v943
    %1307 = vmatpush1.bf16.msra.mxu0 %v942
    %1308 = vmatprep.subr.bf16.mxu0 %v947
    %1309 = vmatpush1.bf16.msra.mxu0 %v946
    %1310 = vmatprep.subr.bf16.mxu0 %v951
    %1311 = vmatpush1.bf16.msra.mxu0 %v950
    %1312 = vmatprep.subr.bf16.mxu0 %v955
    %1313 = vmatpush1.bf16.msra.mxu0 %v954
    %1314 = vmatprep.subr.bf16.mxu0 %v959
    %1315 = vmatpush1.bf16.msra.mxu0 %v958
    %1316 = vmatprep.subr.bf16.mxu0 %v963
    %1317 = vmatpush1.bf16.msra.mxu0 %v962
    %1318 = vmatprep.mubr.bf16.mxu0 %v107
    %1319 = vmatmul.mubr.bf16.gmra.mrb[0].mxu0 %v106
    %v1320 = vpop.f32.mrb[0].mxu0
    %v1321 = vadd.f32 %v309, %v1320
    %v1322 = vpop.f32.mrb[0].mxu0
    %v1323 = vadd.f32 %v313, %v1322
    %v1324 = vpop.f32.mrb[0].mxu0
    %v1325 = vpop.f32.mrb[0].mxu0
    %1326 = vdwg.mxu0
    %1327 = vmatprep.subr.bf16.mxu0 %v967
    %1328 = vmatpush1.bf16.msra.mxu0 %v966
    %1329 = vmatprep.subr.bf16.mxu0 %v971
    %1330 = vmatpush1.bf16.msra.mxu0 %v970
    %1331 = vmatprep.subr.bf16.mxu0 %v975
    %1332 = vmatpush1.bf16.msra.mxu0 %v974
    %1333 = vmatprep.subr.bf16.mxu0 %v979
    %1334 = vmatpush1.bf16.msra.mxu0 %v978
    %1335 = vmatprep.subr.bf16.mxu0 %v983
    %1336 = vmatpush1.bf16.msra.mxu0 %v982
    %1337 = vmatprep.subr.bf16.mxu0 %v987
    %1338 = vmatpush1.bf16.msra.mxu0 %v986
    %1339 = vmatprep.subr.bf16.mxu0 %v991
    %1340 = vmatpush1.bf16.msra.mxu0 %v990
    %1341 = vmatprep.subr.bf16.mxu0 %v995
    %1342 = vmatpush1.bf16.msra.mxu0 %v994
    %1343 = vmatprep.subr.bf16.mxu0 %v999
    %1344 = vmatpush1.bf16.msra.mxu0 %v998
    %1345 = vmatprep.subr.bf16.mxu0 %v1003
    %1346 = vmatpush1.bf16.msra.mxu0 %v1002
    %1347 = vmatprep.subr.bf16.mxu0 %v1007
    %1348 = vmatpush1.bf16.msra.mxu0 %v1006
    %1349 = vmatprep.subr.bf16.mxu0 %v1011
    %1350 = vmatpush1.bf16.msra.mxu0 %v1010
    %1351 = vmatprep.subr.bf16.mxu0 %v1015
    %1352 = vmatpush1.bf16.msra.mxu0 %v1014
    %1353 = vmatprep.subr.bf16.mxu0 %v1019
    %1354 = vmatpush1.bf16.msra.mxu0 %v1018
    %1355 = vmatprep.subr.bf16.mxu0 %v1023
    %1356 = vmatpush1.bf16.msra.mxu0 %v1022
    %1357 = vmatprep.subr.bf16.mxu0 %v1027
    %1358 = vmatpush1.bf16.msra.mxu0 %v1026
    %1359 = vmatprep.mubr.bf16.mxu0 %v109
    %1360 = vmatmul.mubr.bf16.gmra.mrb[0].mxu0 %v108
    %v1361 = vpop.f32.mrb[0].mxu0
    %v1362 = vadd.f32 %v1321, %v1361
    %v1363 = vpop.f32.mrb[0].mxu0
    %v1364 = vadd.f32 %v1323, %v1363
    %v1365 = vpop.f32.mrb[0].mxu0
    %v1366 = vpop.f32.mrb[0].mxu0
    %1367 = vdwg.mxu0
    %1368 = vmatprep.subr.bf16.mxu0 %v1031
    %1369 = vmatpush1.bf16.msra.mxu0 %v1030
    %1370 = vmatprep.subr.bf16.mxu0 %v1035
    %1371 = vmatpush1.bf16.msra.mxu0 %v1034
    %1372 = vmatprep.subr.bf16.mxu0 %v1039
    %1373 = vmatpush1.bf16.msra.mxu0 %v1038
    %1374 = vmatprep.subr.bf16.mxu0 %v1043
    %1375 = vmatpush1.bf16.msra.mxu0 %v1042
    %1376 = vmatprep.subr.bf16.mxu0 %v1047
    %1377 = vmatpush1.bf16.msra.mxu0 %v1046
    %1378 = vmatprep.subr.bf16.mxu0 %v1051
    %1379 = vmatpush1.bf16.msra.mxu0 %v1050
    %1380 = vmatprep.subr.bf16.mxu0 %v1055
    %1381 = vmatpush1.bf16.msra.mxu0 %v1054
    %1382 = vmatprep.subr.bf16.mxu0 %v1059
    %1383 = vmatpush1.bf16.msra.mxu0 %v1058
    %1384 = vmatprep.subr.bf16.mxu0 %v1063
    %1385 = vmatpush1.bf16.msra.mxu0 %v1062
    %1386 = vmatprep.subr.bf16.mxu0 %v1067
    %1387 = vmatpush1.bf16.msra.mxu0 %v1066
    %1388 = vmatprep.subr.bf16.mxu0 %v1071
    %1389 = vmatpush1.bf16.msra.mxu0 %v1070
    %1390 = vmatprep.subr.bf16.mxu0 %v1075
    %1391 = vmatpush1.bf16.msra.mxu0 %v1074
    %1392 = vmatprep.subr.bf16.mxu0 %v1079
    %1393 = vmatpush1.bf16.msra.mxu0 %v1078
    %1394 = vmatprep.subr.bf16.mxu0 %v1083
    %1395 = vmatpush1.bf16.msra.mxu0 %v1082
    %1396 = vmatprep.subr.bf16.mxu0 %v1087
    %1397 = vmatpush1.bf16.msra.mxu0 %v1086
    %1398 = vmatprep.subr.bf16.mxu0 %v1091
    %1399 = vmatpush1.bf16.msra.mxu0 %v1090
    %1400 = vmatprep.mubr.bf16.mxu0 %v111
    %1401 = vmatmul.mubr.bf16.gmra.mrb[0].mxu0 %v110
    %v1402 = vpop.f32.mrb[0].mxu0
    %v1403 = vadd.f32 %v1362, %v1402
    %v1404 = vpop.f32.mrb[0].mxu0
    %v1405 = vadd.f32 %v1364, %v1404
    %v1406 = vpop.f32.mrb[0].mxu0
    %v1407 = vpop.f32.mrb[0].mxu0
    %1408 = vdwg.mxu0
    %1409 = vmatprep.subr.bf16.mxu0 %v905
    %1410 = vmatpush1.bf16.msra.mxu0 %v904
    %1411 = vmatprep.subr.bf16.mxu0 %v909
    %1412 = vmatpush1.bf16.msra.mxu0 %v908
    %1413 = vmatprep.subr.bf16.mxu0 %v913
    %1414 = vmatpush1.bf16.msra.mxu0 %v912
    %1415 = vmatprep.subr.bf16.mxu0 %v917
    %1416 = vmatpush1.bf16.msra.mxu0 %v916
    %1417 = vmatprep.subr.bf16.mxu0 %v921
    %1418 = vmatpush1.bf16.msra.mxu0 %v920
    %1419 = vmatprep.subr.bf16.mxu0 %v925
    %1420 = vmatpush1.bf16.msra.mxu0 %v924
    %1421 = vmatprep.subr.bf16.mxu0 %v929
    %1422 = vmatpush1.bf16.msra.mxu0 %v928
    %1423 = vmatprep.subr.bf16.mxu0 %v933
    %1424 = vmatpush1.bf16.msra.mxu0 %v932
    %1425 = vmatprep.subr.bf16.mxu0 %v937
    %1426 = vmatpush1.bf16.msra.mxu0 %v936
    %1427 = vmatprep.subr.bf16.mxu0 %v941
    %1428 = vmatpush1.bf16.msra.mxu0 %v940
    %1429 = vmatprep.subr.bf16.mxu0 %v945
    %1430 = vmatpush1.bf16.msra.mxu0 %v944
    %1431 = vmatprep.subr.bf16.mxu0 %v949
    %1432 = vmatpush1.bf16.msra.mxu0 %v948
    %1433 = vmatprep.subr.bf16.mxu0 %v953
    %1434 = vmatpush1.bf16.msra.mxu0 %v952
    %1435 = vmatprep.subr.bf16.mxu0 %v957
    %1436 = vmatpush1.bf16.msra.mxu0 %v956
    %1437 = vmatprep.subr.bf16.mxu0 %v961
    %1438 = vmatpush1.bf16.msra.mxu0 %v960
    %1439 = vmatprep.subr.bf16.mxu0 %v965
    %1440 = vmatpush1.bf16.msra.mxu0 %v964
    %1441 = vmatprep.mubr.bf16.mxu0 %v107
    %1442 = vmatmul.mubr.bf16.gmra.mrb[0].mxu0 %v106
    %v1443 = vpop.f32.mrb[0].mxu0
    %v1444 = vadd.f32 %v317, %v1443
    %v1445 = vpop.f32.mrb[0].mxu0
    %v1446 = vadd.f32 %v321, %v1445
    %v1447 = vpop.f32.mrb[0].mxu0
    %v1448 = vpop.f32.mrb[0].mxu0
    %1449 = vdwg.mxu0
    %1450 = vmatprep.subr.bf16.mxu0 %v969
    %1451 = vmatpush1.bf16.msra.mxu0 %v968
    %1452 = vmatprep.subr.bf16.mxu0 %v973
    %1453 = vmatpush1.bf16.msra.mxu0 %v972
    %1454 = vmatprep.subr.bf16.mxu0 %v977
    %1455 = vmatpush1.bf16.msra.mxu0 %v976
    %1456 = vmatprep.subr.bf16.mxu0 %v981
    %1457 = vmatpush1.bf16.msra.mxu0 %v980
    %1458 = vmatprep.subr.bf16.mxu0 %v985
    %1459 = vmatpush1.bf16.msra.mxu0 %v984
    %1460 = vmatprep.subr.bf16.mxu0 %v989
    %1461 = vmatpush1.bf16.msra.mxu0 %v988
    %1462 = vmatprep.subr.bf16.mxu0 %v993
    %1463 = vmatpush1.bf16.msra.mxu0 %v992
    %1464 = vmatprep.subr.bf16.mxu0 %v997
    %1465 = vmatpush1.bf16.msra.mxu0 %v996
    %1466 = vmatprep.subr.bf16.mxu0 %v1001
    %1467 = vmatpush1.bf16.msra.mxu0 %v1000
    %1468 = vmatprep.subr.bf16.mxu0 %v1005
    %1469 = vmatpush1.bf16.msra.mxu0 %v1004
    %1470 = vmatprep.subr.bf16.mxu0 %v1009
    %1471 = vmatpush1.bf16.msra.mxu0 %v1008
    %1472 = vmatprep.subr.bf16.mxu0 %v1013
    %1473 = vmatpush1.bf16.msra.mxu0 %v1012
    %1474 = vmatprep.subr.bf16.mxu0 %v1017
    %1475 = vmatpush1.bf16.msra.mxu0 %v1016
    %1476 = vmatprep.subr.bf16.mxu0 %v1021
    %1477 = vmatpush1.bf16.msra.mxu0 %v1020
    %1478 = vmatprep.subr.bf16.mxu0 %v1025
    %1479 = vmatpush1.bf16.msra.mxu0 %v1024
    %1480 = vmatprep.subr.bf16.mxu0 %v1029
    %1481 = vmatpush1.bf16.msra.mxu0 %v1028
    %1482 = vmatprep.mubr.bf16.mxu0 %v109
    %1483 = vmatmul.mubr.bf16.gmra.mrb[0].mxu0 %v108
    %v1484 = vpop.f32.mrb[0].mxu0
    %v1485 = vadd.f32 %v1444, %v1484
    %v1486 = vpop.f32.mrb[0].mxu0
    %v1487 = vadd.f32 %v1446, %v1486
    %v1488 = vpop.f32.mrb[0].mxu0
    %v1489 = vpop.f32.mrb[0].mxu0
    %1490 = vdwg.mxu0
    %1491 = vmatprep.subr.bf16.mxu0 %v1033
    %1492 = vmatpush1.bf16.msra.mxu0 %v1032
    %1493 = vmatprep.subr.bf16.mxu0 %v1037
    %1494 = vmatpush1.bf16.msra.mxu0 %v1036
    %1495 = vmatprep.subr.bf16.mxu0 %v1041
    %1496 = vmatpush1.bf16.msra.mxu0 %v1040
    %1497 = vmatprep.subr.bf16.mxu0 %v1045
    %1498 = vmatpush1.bf16.msra.mxu0 %v1044
    %1499 = vmatprep.subr.bf16.mxu0 %v1049
    %1500 = vmatpush1.bf16.msra.mxu0 %v1048
    %1501 = vmatprep.subr.bf16.mxu0 %v1053
    %1502 = vmatpush1.bf16.msra.mxu0 %v1052
    %1503 = vmatprep.subr.bf16.mxu0 %v1057
    %1504 = vmatpush1.bf16.msra.mxu0 %v1056
    %1505 = vmatprep.subr.bf16.mxu0 %v1061
    %1506 = vmatpush1.bf16.msra.mxu0 %v1060
    %1507 = vmatprep.subr.bf16.mxu0 %v1065
    %1508 = vmatpush1.bf16.msra.mxu0 %v1064
    %1509 = vmatprep.subr.bf16.mxu0 %v1069
    %1510 = vmatpush1.bf16.msra.mxu0 %v1068
    %1511 = vmatprep.subr.bf16.mxu0 %v1073
    %1512 = vmatpush1.bf16.msra.mxu0 %v1072
    %1513 = vmatprep.subr.bf16.mxu0 %v1077
    %1514 = vmatpush1.bf16.msra.mxu0 %v1076
    %1515 = vmatprep.subr.bf16.mxu0 %v1081
    %1516 = vmatpush1.bf16.msra.mxu0 %v1080
    %1517 = vmatprep.subr.bf16.mxu0 %v1085
    %1518 = vmatpush1.bf16.msra.mxu0 %v1084
    %1519 = vmatprep.subr.bf16.mxu0 %v1089
    %1520 = vmatpush1.bf16.msra.mxu0 %v1088
    %1521 = vmatprep.subr.bf16.mxu0 %v1093
    %1522 = vmatpush1.bf16.msra.mxu0 %v1092
    %1523 = vmatprep.mubr.bf16.mxu0 %v111
    %1524 = vmatmul.mubr.bf16.gmra.mrb[0].mxu0 %v110
    %v1525 = vpop.f32.mrb[0].mxu0
    %v1526 = vadd.f32 %v1485, %v1525
    %v1527 = vpop.f32.mrb[0].mxu0
    %v1528 = vadd.f32 %v1487, %v1527
    %v1529 = vpop.f32.mrb[0].mxu0
    %v1530 = vpop.f32.mrb[0].mxu0
    %1531 = vdwg.mxu0
    %v1532 = vmax.f32 %v1403, 0.0
    %v1533 = vmax.f32 %v1405, 0.0
    %v1534 = vmax.f32 %v1526, 0.0
    %v1535 = vmax.f32 %v1528, 0.0
    %v1536 = vpack.c.bf16 %v1532, %v1532
    %v1537 = vpack.c.bf16 %v1533, %v1533
    %v1538 = vpack.c.bf16 %v1534, %v1534
    %v1539 = vpack.c.bf16 %v1535, %v1535
    %v1540 = vld [vmem:[#allocation7] sm:$0xff]
    %v1541 = vld [vmem:[#allocation7 + $0x8] sm:$0xff]
    %v1542 = vld [vmem:[#allocation7 + $0x10] sm:$0xff]
    %v1543 = vld [vmem:[#allocation7 + $0x18] sm:$0xff]
    %v1544 = vld [vmem:[#allocation7 + $0x20] sm:$0xff]
    %v1545 = vld [vmem:[#allocation7 + $0x28] sm:$0xff]
    %v1546 = vld [vmem:[#allocation7 + $0x30] sm:$0xff]
    %v1547 = vld [vmem:[#allocation7 + $0x38] sm:$0xff]
    %v1548 = vld [vmem:[#allocation7 + $0x40] sm:$0xff]
    %v1549 = vld [vmem:[#allocation7 + $0x48] sm:$0xff]
    %v1550 = vld [vmem:[#allocation7 + $0x50] sm:$0xff]
    %v1551 = vld [vmem:[#allocation7 + $0x58] sm:$0xff]
    %v1552 = vld [vmem:[#allocation7 + $0x60] sm:$0xff]
    %v1553 = vld [vmem:[#allocation7 + $0x68] sm:$0xff]
    %v1554 = vld [vmem:[#allocation7 + $0x70] sm:$0xff]
    %v1555 = vld [vmem:[#allocation7 + $0x78] sm:$0xff]
    %v1556 = vld [vmem:[#allocation7 + $0x80] sm:$0xff]
    %v1557 = vld [vmem:[#allocation7 + $0x88] sm:$0xff]
    %v1558 = vld [vmem:[#allocation7 + $0x90] sm:$0xff]
    %v1559 = vld [vmem:[#allocation7 + $0x98] sm:$0xff]
    %v1560 = vld [vmem:[#allocation7 + $0xa0] sm:$0xff]
    %v1561 = vld [vmem:[#allocation7 + $0xa8] sm:$0xff]
    %v1562 = vld [vmem:[#allocation7 + $0xb0] sm:$0xff]
    %v1563 = vld [vmem:[#allocation7 + $0xb8] sm:$0xff]
    %v1564 = vld [vmem:[#allocation7 + $0xc0] sm:$0xff]
    %v1565 = vld [vmem:[#allocation7 + $0xc8] sm:$0xff]
    %v1566 = vld [vmem:[#allocation7 + $0xd0] sm:$0xff]
    %v1567 = vld [vmem:[#allocation7 + $0xd8] sm:$0xff]
    %v1568 = vld [vmem:[#allocation7 + $0xe0] sm:$0xff]
    %v1569 = vld [vmem:[#allocation7 + $0xe8] sm:$0xff]
    %v1570 = vld [vmem:[#allocation7 + $0xf0] sm:$0xff]
    %v1571 = vld [vmem:[#allocation7 + $0xf8] sm:$0xff]
    %v1572 = vld [vmem:[#allocation7 + $0x100] sm:$0xff]
    %v1573 = vld [vmem:[#allocation7 + $0x108] sm:$0xff]
    %v1574 = vld [vmem:[#allocation7 + $0x110] sm:$0xff]
    %v1575 = vld [vmem:[#allocation7 + $0x118] sm:$0xff]
    %v1576 = vld [vmem:[#allocation7 + $0x120] sm:$0xff]
    %v1577 = vld [vmem:[#allocation7 + $0x128] sm:$0xff]
    %v1578 = vld [vmem:[#allocation7 + $0x130] sm:$0xff]
    %v1579 = vld [vmem:[#allocation7 + $0x138] sm:$0xff]
    %v1580 = vld [vmem:[#allocation7 + $0x140] sm:$0xff]
    %v1581 = vld [vmem:[#allocation7 + $0x148] sm:$0xff]
    %v1582 = vld [vmem:[#allocation7 + $0x150] sm:$0xff]
    %v1583 = vld [vmem:[#allocation7 + $0x158] sm:$0xff]
    %v1584 = vld [vmem:[#allocation7 + $0x160] sm:$0xff]
    %v1585 = vld [vmem:[#allocation7 + $0x168] sm:$0xff]
    %v1586 = vld [vmem:[#allocation7 + $0x170] sm:$0xff]
    %v1587 = vld [vmem:[#allocation7 + $0x178] sm:$0xff]
    %v1588 = vld [vmem:[#allocation7 + $0x180] sm:$0xff]
    %v1589 = vld [vmem:[#allocation7 + $0x188] sm:$0xff]
    %v1590 = vld [vmem:[#allocation7 + $0x190] sm:$0xff]
    %v1591 = vld [vmem:[#allocation7 + $0x198] sm:$0xff]
    %v1592 = vld [vmem:[#allocation7 + $0x1a0] sm:$0xff]
    %v1593 = vld [vmem:[#allocation7 + $0x1a8] sm:$0xff]
    %v1594 = vld [vmem:[#allocation7 + $0x1b0] sm:$0xff]
    %v1595 = vld [vmem:[#allocation7 + $0x1b8] sm:$0xff]
    %v1596 = vld [vmem:[#allocation7 + $0x1c0] sm:$0xff]
    %v1597 = vld [vmem:[#allocation7 + $0x1c8] sm:$0xff]
    %v1598 = vld [vmem:[#allocation7 + $0x1d0] sm:$0xff]
    %v1599 = vld [vmem:[#allocation7 + $0x1d8] sm:$0xff]
    %v1600 = vld [vmem:[#allocation7 + $0x1e0] sm:$0xff]
    %v1601 = vld [vmem:[#allocation7 + $0x1e8] sm:$0xff]
    %v1602 = vld [vmem:[#allocation7 + $0x1f0] sm:$0xff]
    %v1603 = vld [vmem:[#allocation7 + $0x1f8] sm:$0xff]
    %v1604 = vld [vmem:[%s4] sm:$0x3]
    %v1606 = vlaneseq
    %v1607 = vshrl.u32 %v1606, 7
    %v1608 = vsub.s32 0, %v1607
    %v1609 = vrot.slane %v1604, %v1608
    %v1610 = vlaneseq
    %v1611 = vshrl.u32 %v1610, 7
    %v1612 = vsub.s32 1, %v1611
    %v1613 = vrot.slane %v1604, %v1612
    %v1680 = vunpack.c.l.b16 %v1540
    %v1681 = vunpack.c.h.b16 %v1540
    %v1682 = vunpack.c.l.b16 %v1541
    %v1683 = vunpack.c.h.b16 %v1541
    %v1684 = vunpack.c.l.b16 %v1542
    %v1685 = vunpack.c.h.b16 %v1542
    %v1686 = vunpack.c.l.b16 %v1543
    %v1687 = vunpack.c.h.b16 %v1543
    %v1688 = vunpack.c.l.b16 %v1544
    %v1689 = vunpack.c.h.b16 %v1544
    %v1690 = vunpack.c.l.b16 %v1545
    %v1691 = vunpack.c.h.b16 %v1545
    %v1692 = vunpack.c.l.b16 %v1546
    %v1693 = vunpack.c.h.b16 %v1546
    %v1694 = vunpack.c.l.b16 %v1547
    %v1695 = vunpack.c.h.b16 %v1547
    %v1696 = vunpack.c.l.b16 %v1548
    %v1697 = vunpack.c.h.b16 %v1548
    %v1698 = vunpack.c.l.b16 %v1549
    %v1699 = vunpack.c.h.b16 %v1549
    %v1700 = vunpack.c.l.b16 %v1550
    %v1701 = vunpack.c.h.b16 %v1550
    %v1702 = vunpack.c.l.b16 %v1551
    %v1703 = vunpack.c.h.b16 %v1551
    %v1704 = vunpack.c.l.b16 %v1552
    %v1705 = vunpack.c.h.b16 %v1552
    %v1706 = vunpack.c.l.b16 %v1553
    %v1707 = vunpack.c.h.b16 %v1553
    %v1708 = vunpack.c.l.b16 %v1554
    %v1709 = vunpack.c.h.b16 %v1554
    %v1710 = vunpack.c.l.b16 %v1555
    %v1711 = vunpack.c.h.b16 %v1555
    %v1712 = vunpack.c.l.b16 %v1556
    %v1713 = vunpack.c.h.b16 %v1556
    %v1714 = vunpack.c.l.b16 %v1557
    %v1715 = vunpack.c.h.b16 %v1557
    %v1716 = vunpack.c.l.b16 %v1558
    %v1717 = vunpack.c.h.b16 %v1558
    %v1718 = vunpack.c.l.b16 %v1559
    %v1719 = vunpack.c.h.b16 %v1559
    %v1720 = vunpack.c.l.b16 %v1560
    %v1721 = vunpack.c.h.b16 %v1560
    %v1722 = vunpack.c.l.b16 %v1561
    %v1723 = vunpack.c.h.b16 %v1561
    %v1724 = vunpack.c.l.b16 %v1562
    %v1725 = vunpack.c.h.b16 %v1562
    %v1726 = vunpack.c.l.b16 %v1563
    %v1727 = vunpack.c.h.b16 %v1563
    %v1728 = vunpack.c.l.b16 %v1564
    %v1729 = vunpack.c.h.b16 %v1564
    %v1730 = vunpack.c.l.b16 %v1565
    %v1731 = vunpack.c.h.b16 %v1565
    %v1732 = vunpack.c.l.b16 %v1566
    %v1733 = vunpack.c.h.b16 %v1566
    %v1734 = vunpack.c.l.b16 %v1567
    %v1735 = vunpack.c.h.b16 %v1567
    %v1736 = vunpack.c.l.b16 %v1568
    %v1737 = vunpack.c.h.b16 %v1568
    %v1738 = vunpack.c.l.b16 %v1569
    %v1739 = vunpack.c.h.b16 %v1569
    %v1740 = vunpack.c.l.b16 %v1570
    %v1741 = vunpack.c.h.b16 %v1570
    %v1742 = vunpack.c.l.b16 %v1571
    %v1743 = vunpack.c.h.b16 %v1571
    %v1744 = vunpack.c.l.b16 %v1572
    %v1745 = vunpack.c.h.b16 %v1572
    %v1746 = vunpack.c.l.b16 %v1573
    %v1747 = vunpack.c.h.b16 %v1573
    %v1748 = vunpack.c.l.b16 %v1574
    %v1749 = vunpack.c.h.b16 %v1574
    %v1750 = vunpack.c.l.b16 %v1575
    %v1751 = vunpack.c.h.b16 %v1575
    %v1752 = vunpack.c.l.b16 %v1576
    %v1753 = vunpack.c.h.b16 %v1576
    %v1754 = vunpack.c.l.b16 %v1577
    %v1755 = vunpack.c.h.b16 %v1577
    %v1756 = vunpack.c.l.b16 %v1578
    %v1757 = vunpack.c.h.b16 %v1578
    %v1758 = vunpack.c.l.b16 %v1579
    %v1759 = vunpack.c.h.b16 %v1579
    %v1760 = vunpack.c.l.b16 %v1580
    %v1761 = vunpack.c.h.b16 %v1580
    %v1762 = vunpack.c.l.b16 %v1581
    %v1763 = vunpack.c.h.b16 %v1581
    %v1764 = vunpack.c.l.b16 %v1582
    %v1765 = vunpack.c.h.b16 %v1582
    %v1766 = vunpack.c.l.b16 %v1583
    %v1767 = vunpack.c.h.b16 %v1583
    %v1768 = vunpack.c.l.b16 %v1584
    %v1769 = vunpack.c.h.b16 %v1584
    %v1770 = vunpack.c.l.b16 %v1585
    %v1771 = vunpack.c.h.b16 %v1585
    %v1772 = vunpack.c.l.b16 %v1586
    %v1773 = vunpack.c.h.b16 %v1586
    %v1774 = vunpack.c.l.b16 %v1587
    %v1775 = vunpack.c.h.b16 %v1587
    %v1776 = vunpack.c.l.b16 %v1588
    %v1777 = vunpack.c.h.b16 %v1588
    %v1778 = vunpack.c.l.b16 %v1589
    %v1779 = vunpack.c.h.b16 %v1589
    %v1780 = vunpack.c.l.b16 %v1590
    %v1781 = vunpack.c.h.b16 %v1590
    %v1782 = vunpack.c.l.b16 %v1591
    %v1783 = vunpack.c.h.b16 %v1591
    %v1784 = vunpack.c.l.b16 %v1592
    %v1785 = vunpack.c.h.b16 %v1592
    %v1786 = vunpack.c.l.b16 %v1593
    %v1787 = vunpack.c.h.b16 %v1593
    %v1788 = vunpack.c.l.b16 %v1594
    %v1789 = vunpack.c.h.b16 %v1594
    %v1790 = vunpack.c.l.b16 %v1595
    %v1791 = vunpack.c.h.b16 %v1595
    %v1792 = vunpack.c.l.b16 %v1596
    %v1793 = vunpack.c.h.b16 %v1596
    %v1794 = vunpack.c.l.b16 %v1597
    %v1795 = vunpack.c.h.b16 %v1597
    %v1796 = vunpack.c.l.b16 %v1598
    %v1797 = vunpack.c.h.b16 %v1598
    %v1798 = vunpack.c.l.b16 %v1599
    %v1799 = vunpack.c.h.b16 %v1599
    %v1800 = vunpack.c.l.b16 %v1600
    %v1801 = vunpack.c.h.b16 %v1600
    %v1802 = vunpack.c.l.b16 %v1601
    %v1803 = vunpack.c.h.b16 %v1601
    %v1804 = vunpack.c.l.b16 %v1602
    %v1805 = vunpack.c.h.b16 %v1602
    %v1806 = vunpack.c.l.b16 %v1603
    %v1807 = vunpack.c.h.b16 %v1603
    %v1808 = vpack.c.b16 %v1682, %v1680
    %v1809 = vpack.c.b16 %v1683, %v1681
    %v1810 = vpack.c.b16 %v1686, %v1684
    %v1811 = vpack.c.b16 %v1687, %v1685
    %v1812 = vpack.c.b16 %v1690, %v1688
    %v1813 = vpack.c.b16 %v1691, %v1689
    %v1814 = vpack.c.b16 %v1694, %v1692
    %v1815 = vpack.c.b16 %v1695, %v1693
    %v1816 = vpack.c.b16 %v1698, %v1696
    %v1817 = vpack.c.b16 %v1699, %v1697
    %v1818 = vpack.c.b16 %v1702, %v1700
    %v1819 = vpack.c.b16 %v1703, %v1701
    %v1820 = vpack.c.b16 %v1706, %v1704
    %v1821 = vpack.c.b16 %v1707, %v1705
    %v1822 = vpack.c.b16 %v1710, %v1708
    %v1823 = vpack.c.b16 %v1711, %v1709
    %v1824 = vpack.c.b16 %v1714, %v1712
    %v1825 = vpack.c.b16 %v1715, %v1713
    %v1826 = vpack.c.b16 %v1718, %v1716
    %v1827 = vpack.c.b16 %v1719, %v1717
    %v1828 = vpack.c.b16 %v1722, %v1720
    %v1829 = vpack.c.b16 %v1723, %v1721
    %v1830 = vpack.c.b16 %v1726, %v1724
    %v1831 = vpack.c.b16 %v1727, %v1725
    %v1832 = vpack.c.b16 %v1730, %v1728
    %v1833 = vpack.c.b16 %v1731, %v1729
    %v1834 = vpack.c.b16 %v1734, %v1732
    %v1835 = vpack.c.b16 %v1735, %v1733
    %v1836 = vpack.c.b16 %v1738, %v1736
    %v1837 = vpack.c.b16 %v1739, %v1737
    %v1838 = vpack.c.b16 %v1742, %v1740
    %v1839 = vpack.c.b16 %v1743, %v1741
    %v1840 = vpack.c.b16 %v1746, %v1744
    %v1841 = vpack.c.b16 %v1747, %v1745
    %v1842 = vpack.c.b16 %v1750, %v1748
    %v1843 = vpack.c.b16 %v1751, %v1749
    %v1844 = vpack.c.b16 %v1754, %v1752
    %v1845 = vpack.c.b16 %v1755, %v1753
    %v1846 = vpack.c.b16 %v1758, %v1756
    %v1847 = vpack.c.b16 %v1759, %v1757
    %v1848 = vpack.c.b16 %v1762, %v1760
    %v1849 = vpack.c.b16 %v1763, %v1761
    %v1850 = vpack.c.b16 %v1766, %v1764
    %v1851 = vpack.c.b16 %v1767, %v1765
    %v1852 = vpack.c.b16 %v1770, %v1768
    %v1853 = vpack.c.b16 %v1771, %v1769
    %v1854 = vpack.c.b16 %v1774, %v1772
    %v1855 = vpack.c.b16 %v1775, %v1773
    %v1856 = vpack.c.b16 %v1778, %v1776
    %v1857 = vpack.c.b16 %v1779, %v1777
    %v1858 = vpack.c.b16 %v1782, %v1780
    %v1859 = vpack.c.b16 %v1783, %v1781
    %v1860 = vpack.c.b16 %v1786, %v1784
    %v1861 = vpack.c.b16 %v1787, %v1785
    %v1862 = vpack.c.b16 %v1790, %v1788
    %v1863 = vpack.c.b16 %v1791, %v1789
    %v1864 = vpack.c.b16 %v1794, %v1792
    %v1865 = vpack.c.b16 %v1795, %v1793
    %v1866 = vpack.c.b16 %v1798, %v1796
    %v1867 = vpack.c.b16 %v1799, %v1797
    %v1868 = vpack.c.b16 %v1802, %v1800
    %v1869 = vpack.c.b16 %v1803, %v1801
    %v1870 = vpack.c.b16 %v1806, %v1804
    %v1871 = vpack.c.b16 %v1807, %v1805
    %1936 = vmatprep.subr.bf16.mxu0 %v1809
    %1937 = vmatpush1.bf16.msra.mxu0 %v1808
    %1938 = vmatprep.subr.bf16.mxu0 %v1811
    %1939 = vmatpush1.bf16.msra.mxu0 %v1810
    %1940 = vmatprep.subr.bf16.mxu0 %v1813
    %1941 = vmatpush1.bf16.msra.mxu0 %v1812
    %1942 = vmatprep.subr.bf16.mxu0 %v1815
    %1943 = vmatpush1.bf16.msra.mxu0 %v1814
    %1944 = vmatprep.subr.bf16.mxu0 %v1817
    %1945 = vmatpush1.bf16.msra.mxu0 %v1816
    %1946 = vmatprep.subr.bf16.mxu0 %v1819
    %1947 = vmatpush1.bf16.msra.mxu0 %v1818
    %1948 = vmatprep.subr.bf16.mxu0 %v1821
    %1949 = vmatpush1.bf16.msra.mxu0 %v1820
    %1950 = vmatprep.subr.bf16.mxu0 %v1823
    %1951 = vmatpush1.bf16.msra.mxu0 %v1822
    %1952 = vmatprep.subr.bf16.mxu0 %v1825
    %1953 = vmatpush1.bf16.msra.mxu0 %v1824
    %1954 = vmatprep.subr.bf16.mxu0 %v1827
    %1955 = vmatpush1.bf16.msra.mxu0 %v1826
    %1956 = vmatprep.subr.bf16.mxu0 %v1829
    %1957 = vmatpush1.bf16.msra.mxu0 %v1828
    %1958 = vmatprep.subr.bf16.mxu0 %v1831
    %1959 = vmatpush1.bf16.msra.mxu0 %v1830
    %1960 = vmatprep.subr.bf16.mxu0 %v1833
    %1961 = vmatpush1.bf16.msra.mxu0 %v1832
    %1962 = vmatprep.subr.bf16.mxu0 %v1835
    %1963 = vmatpush1.bf16.msra.mxu0 %v1834
    %1964 = vmatprep.subr.bf16.mxu0 %v1837
    %1965 = vmatpush1.bf16.msra.mxu0 %v1836
    %1966 = vmatprep.subr.bf16.mxu0 %v1839
    %1967 = vmatpush1.bf16.msra.mxu0 %v1838
    %1968 = vmatprep.mubr.bf16.mxu0 %v1537
    %1969 = vmatmul.mubr.bf16.gmra.mrb[0].mxu0 %v1536
    %v1970 = vpop.f32.mrb[0].mxu0
    %v1971 = vadd.f32 %v1609, %v1970
    %v1972 = vpop.f32.mrb[0].mxu0
    %v1973 = vadd.f32 %v1613, %v1972
    %v1974 = vpop.f32.mrb[0].mxu0
    %v1975 = vpop.f32.mrb[0].mxu0
    %1976 = vdwg.mxu0
    %1977 = vmatprep.subr.bf16.mxu0 %v1841
    %1978 = vmatpush1.bf16.msra.mxu0 %v1840
    %1979 = vmatprep.subr.bf16.mxu0 %v1843
    %1980 = vmatpush1.bf16.msra.mxu0 %v1842
    %1981 = vmatprep.subr.bf16.mxu0 %v1845
    %1982 = vmatpush1.bf16.msra.mxu0 %v1844
    %1983 = vmatprep.subr.bf16.mxu0 %v1847
    %1984 = vmatpush1.bf16.msra.mxu0 %v1846
    %1985 = vmatprep.subr.bf16.mxu0 %v1849
    %1986 = vmatpush1.bf16.msra.mxu0 %v1848
    %1987 = vmatprep.subr.bf16.mxu0 %v1851
    %1988 = vmatpush1.bf16.msra.mxu0 %v1850
    %1989 = vmatprep.subr.bf16.mxu0 %v1853
    %1990 = vmatpush1.bf16.msra.mxu0 %v1852
    %1991 = vmatprep.subr.bf16.mxu0 %v1855
    %1992 = vmatpush1.bf16.msra.mxu0 %v1854
    %1993 = vmatprep.subr.bf16.mxu0 %v1857
    %1994 = vmatpush1.bf16.msra.mxu0 %v1856
    %1995 = vmatprep.subr.bf16.mxu0 %v1859
    %1996 = vmatpush1.bf16.msra.mxu0 %v1858
    %1997 = vmatprep.subr.bf16.mxu0 %v1861
    %1998 = vmatpush1.bf16.msra.mxu0 %v1860
    %1999 = vmatprep.subr.bf16.mxu0 %v1863
    %2000 = vmatpush1.bf16.msra.mxu0 %v1862
    %2001 = vmatprep.subr.bf16.mxu0 %v1865
    %2002 = vmatpush1.bf16.msra.mxu0 %v1864
    %2003 = vmatprep.subr.bf16.mxu0 %v1867
    %2004 = vmatpush1.bf16.msra.mxu0 %v1866
    %2005 = vmatprep.subr.bf16.mxu0 %v1869
    %2006 = vmatpush1.bf16.msra.mxu0 %v1868
    %2007 = vmatprep.subr.bf16.mxu0 %v1871
    %2008 = vmatpush1.bf16.msra.mxu0 %v1870
    %2009 = vmatprep.mubr.bf16.mxu0 %v1539
    %2010 = vmatmul.mubr.bf16.gmra.mrb[0].mxu0 %v1538
    %v2011 = vpop.f32.mrb[0].mxu0
    %v2012 = vadd.f32 %v1971, %v2011
    %v2013 = vpop.f32.mrb[0].mxu0
    %v2014 = vadd.f32 %v1973, %v2013
    %v2015 = vpop.f32.mrb[0].mxu0
    %v2016 = vpop.f32.mrb[0].mxu0
    %2017 = vdwg.mxu0
    %v2018 = vmax.f32 %v2012, 0.0
    %v2019 = vmax.f32 %v2014, 0.0
    %v2020 = vpack.c.bf16 %v2018, %v2018
    %v2021 = vpack.c.bf16 %v2019, %v2019
    %v2022 = vld [vmem:[#allocation8] sm:$0xf]
    %v2023 = vld [vmem:[#allocation8 + $0x4] sm:$0xf]
    %v2024 = vld [vmem:[#allocation8 + $0x8] sm:$0xf]
    %v2025 = vld [vmem:[#allocation8 + $0xc] sm:$0xf]
    %v2026 = vld [vmem:[#allocation8 + $0x10] sm:$0xf]
    %v2027 = vld [vmem:[#allocation8 + $0x14] sm:$0xf]
    %v2028 = vld [vmem:[#allocation8 + $0x18] sm:$0xf]
    %v2029 = vld [vmem:[#allocation8 + $0x1c] sm:$0xf]
    %v2030 = vld [vmem:[#allocation8 + $0x20] sm:$0xf]
    %v2031 = vld [vmem:[#allocation8 + $0x24] sm:$0xf]
    %v2032 = vld [vmem:[#allocation8 + $0x28] sm:$0xf]
    %v2033 = vld [vmem:[#allocation8 + $0x2c] sm:$0xf]
    %v2034 = vld [vmem:[#allocation8 + $0x30] sm:$0xf]
    %v2035 = vld [vmem:[#allocation8 + $0x34] sm:$0xf]
    %v2036 = vld [vmem:[#allocation8 + $0x38] sm:$0xf]
    %v2037 = vld [vmem:[#allocation8 + $0x3c] sm:$0xf]
    %v2038 = vld [vmem:[#allocation8 + $0x40] sm:$0xf]
    %v2039 = vld [vmem:[#allocation8 + $0x44] sm:$0xf]
    %v2040 = vld [vmem:[#allocation8 + $0x48] sm:$0xf]
    %v2041 = vld [vmem:[#allocation8 + $0x4c] sm:$0xf]
    %v2042 = vld [vmem:[#allocation8 + $0x50] sm:$0xf]
    %v2043 = vld [vmem:[#allocation8 + $0x54] sm:$0xf]
    %v2044 = vld [vmem:[#allocation8 + $0x58] sm:$0xf]
    %v2045 = vld [vmem:[#allocation8 + $0x5c] sm:$0xf]
    %v2046 = vld [vmem:[#allocation8 + $0x60] sm:$0xf]
    %v2047 = vld [vmem:[#allocation8 + $0x64] sm:$0xf]
    %v2048 = vld [vmem:[#allocation8 + $0x68] sm:$0xf]
    %v2049 = vld [vmem:[#allocation8 + $0x6c] sm:$0xf]
    %v2050 = vld [vmem:[#allocation8 + $0x70] sm:$0xf]
    %v2051 = vld [vmem:[#allocation8 + $0x74] sm:$0xf]
    %v2052 = vld [vmem:[#allocation8 + $0x78] sm:$0xf]
    %v2053 = vld [vmem:[#allocation8 + $0x7c] sm:$0xf]
    %v2054 = vld [vmem:[%s6] sm:$0x1]
    %v2056 = vlaneseq
    %v2057 = vshrl.u32 %v2056, 7
    %v2058 = vsub.s32 0, %v2057
    %v2059 = vrot.slane %v2054, %v2058
    %v2093 = vunpack.c.l.b16 %v2022
    %v2094 = vunpack.c.l.b16 %v2023
    %v2095 = vunpack.c.l.b16 %v2024
    %v2096 = vunpack.c.l.b16 %v2025
    %v2097 = vunpack.c.l.b16 %v2026
    %v2098 = vunpack.c.l.b16 %v2027
    %v2099 = vunpack.c.l.b16 %v2028
    %v2100 = vunpack.c.l.b16 %v2029
    %v2101 = vunpack.c.l.b16 %v2030
    %v2102 = vunpack.c.l.b16 %v2031
    %v2103 = vunpack.c.l.b16 %v2032
    %v2104 = vunpack.c.l.b16 %v2033
    %v2105 = vunpack.c.l.b16 %v2034
    %v2106 = vunpack.c.l.b16 %v2035
    %v2107 = vunpack.c.l.b16 %v2036
    %v2108 = vunpack.c.l.b16 %v2037
    %v2109 = vunpack.c.l.b16 %v2038
    %v2110 = vunpack.c.l.b16 %v2039
    %v2111 = vunpack.c.l.b16 %v2040
    %v2112 = vunpack.c.l.b16 %v2041
    %v2113 = vunpack.c.l.b16 %v2042
    %v2114 = vunpack.c.l.b16 %v2043
    %v2115 = vunpack.c.l.b16 %v2044
    %v2116 = vunpack.c.l.b16 %v2045
    %v2117 = vunpack.c.l.b16 %v2046
    %v2118 = vunpack.c.l.b16 %v2047
    %v2119 = vunpack.c.l.b16 %v2048
    %v2120 = vunpack.c.l.b16 %v2049
    %v2121 = vunpack.c.l.b16 %v2050
    %v2122 = vunpack.c.l.b16 %v2051
    %v2123 = vunpack.c.l.b16 %v2052
    %v2124 = vunpack.c.l.b16 %v2053
    %v2125 = vpack.c.b16 %v2094, %v2093
    %v2126 = vpack.c.b16 %v2096, %v2095
    %v2127 = vpack.c.b16 %v2098, %v2097
    %v2128 = vpack.c.b16 %v2100, %v2099
    %v2129 = vpack.c.b16 %v2102, %v2101
    %v2130 = vpack.c.b16 %v2104, %v2103
    %v2131 = vpack.c.b16 %v2106, %v2105
    %v2132 = vpack.c.b16 %v2108, %v2107
    %v2133 = vpack.c.b16 %v2110, %v2109
    %v2134 = vpack.c.b16 %v2112, %v2111
    %v2135 = vpack.c.b16 %v2114, %v2113
    %v2136 = vpack.c.b16 %v2116, %v2115
    %v2137 = vpack.c.b16 %v2118, %v2117
    %v2138 = vpack.c.b16 %v2120, %v2119
    %v2139 = vpack.c.b16 %v2122, %v2121
    %v2140 = vpack.c.b16 %v2124, %v2123
    %2157 = vmatprep.subr.bf16.mxu0 0
    %2158 = vmatpush1.bf16.msra.mxu0 %v2125
    %2159 = vmatprep.subr.bf16.mxu0 0
    %2160 = vmatpush1.bf16.msra.mxu0 %v2126
    %2161 = vmatprep.subr.bf16.mxu0 0
    %2162 = vmatpush1.bf16.msra.mxu0 %v2127
    %2163 = vmatprep.subr.bf16.mxu0 0
    %2164 = vmatpush1.bf16.msra.mxu0 %v2128
    %2165 = vmatprep.subr.bf16.mxu0 0
    %2166 = vmatpush1.bf16.msra.mxu0 %v2129
    %2167 = vmatprep.subr.bf16.mxu0 0
    %2168 = vmatpush1.bf16.msra.mxu0 %v2130
    %2169 = vmatprep.subr.bf16.mxu0 0
    %2170 = vmatpush1.bf16.msra.mxu0 %v2131
    %2171 = vmatprep.subr.bf16.mxu0 0
    %2172 = vmatpush1.bf16.msra.mxu0 %v2132
    %2173 = vmatprep.subr.bf16.mxu0 0
    %2174 = vmatpush1.bf16.msra.mxu0 %v2133
    %2175 = vmatprep.subr.bf16.mxu0 0
    %2176 = vmatpush1.bf16.msra.mxu0 %v2134
    %2177 = vmatprep.subr.bf16.mxu0 0
    %2178 = vmatpush1.bf16.msra.mxu0 %v2135
    %2179 = vmatprep.subr.bf16.mxu0 0
    %2180 = vmatpush1.bf16.msra.mxu0 %v2136
    %2181 = vmatprep.subr.bf16.mxu0 0
    %2182 = vmatpush1.bf16.msra.mxu0 %v2137
    %2183 = vmatprep.subr.bf16.mxu0 0
    %2184 = vmatpush1.bf16.msra.mxu0 %v2138
    %2185 = vmatprep.subr.bf16.mxu0 0
    %2186 = vmatpush1.bf16.msra.mxu0 %v2139
    %2187 = vmatprep.subr.bf16.mxu0 0
    %2188 = vmatpush1.bf16.msra.mxu0 %v2140
    %2189 = vmatprep.mubr.bf16.mxu0 %v2021
    %2190 = vmatmul.mubr.bf16.gmra.mrb[0].mxu0 %v2020
    %v2191 = vpop.f32.mrb[0].mxu0
    %v2192 = vadd.f32 %v2059, %v2191
    %v2193 = vpop.f32.mrb[0].mxu0
    %v2194 = vpop.f32.mrb[0].mxu0
    %v2195 = vpop.f32.mrb[0].mxu0
    %2196 = vdwg.mxu0
    %v2197 = vmax.f32 %v2192, 0.0
    %v2198 = vpack.c.bf16 %v2197, %v2197
    %v2199 = vld [vmem:[#allocation10] sm:$0xf]
    %v2200 = vld [vmem:[#allocation10 + $0x4] sm:$0xf]
    %v2201 = vld [vmem:[#allocation10 + $0x8] sm:$0xf]
    %v2202 = vld [vmem:[#allocation10 + $0xc] sm:$0xf]
    %v2203 = vld [vmem:[#allocation10 + $0x10] sm:$0xf]
    %v2204 = vld [vmem:[#allocation10 + $0x14] sm:$0xf]
    %v2205 = vld [vmem:[#allocation10 + $0x18] sm:$0xf]
    %v2206 = vld [vmem:[#allocation10 + $0x1c] sm:$0xf]
    %v2207 = vld [vmem:[#allocation10 + $0x20] sm:$0xf]
    %v2208 = vld [vmem:[#allocation10 + $0x24] sm:$0xf]
    %v2209 = vld [vmem:[#allocation10 + $0x28] sm:$0xf]
    %v2210 = vld [vmem:[#allocation10 + $0x2c] sm:$0xf]
    %v2211 = vld [vmem:[#allocation10 + $0x30] sm:$0xf]
    %v2212 = vld [vmem:[#allocation10 + $0x34] sm:$0xf]
    %v2213 = vld [vmem:[#allocation10 + $0x38] sm:$0xf]
    %v2214 = vld [vmem:[#allocation10 + $0x3c] sm:$0xf]
    %v2215 = vld [vmem:[%s8] sm:$0x1]
    %v2217 = vlaneseq
    %v2218 = vshrl.u32 %v2217, 7
    %v2219 = vsub.s32 0, %v2218
    %v2220 = vrot.slane %v2215, %v2219
    %v2238 = vunpack.c.l.b16 %v2199
    %v2239 = vunpack.c.l.b16 %v2200
    %v2240 = vunpack.c.l.b16 %v2201
    %v2241 = vunpack.c.l.b16 %v2202
    %v2242 = vunpack.c.l.b16 %v2203
    %v2243 = vunpack.c.l.b16 %v2204
    %v2244 = vunpack.c.l.b16 %v2205
    %v2245 = vunpack.c.l.b16 %v2206
    %v2246 = vunpack.c.l.b16 %v2207
    %v2247 = vunpack.c.l.b16 %v2208
    %v2248 = vunpack.c.l.b16 %v2209
    %v2249 = vunpack.c.l.b16 %v2210
    %v2250 = vunpack.c.l.b16 %v2211
    %v2251 = vunpack.c.l.b16 %v2212
    %v2252 = vunpack.c.l.b16 %v2213
    %v2253 = vunpack.c.l.b16 %v2214
    %v2254 = vpack.c.b16 %v2239, %v2238
    %v2255 = vpack.c.b16 %v2241, %v2240
    %v2256 = vpack.c.b16 %v2243, %v2242
    %v2257 = vpack.c.b16 %v2245, %v2244
    %v2258 = vpack.c.b16 %v2247, %v2246
    %v2259 = vpack.c.b16 %v2249, %v2248
    %v2260 = vpack.c.b16 %v2251, %v2250
    %v2261 = vpack.c.b16 %v2253, %v2252
    %2270 = vmatprep.subr.bf16.mxu0 0
    %2271 = vmatpush1.bf16.msra.mxu0 %v2254
    %2272 = vmatprep.subr.bf16.mxu0 0
    %2273 = vmatpush1.bf16.msra.mxu0 %v2255
    %2274 = vmatprep.subr.bf16.mxu0 0
    %2275 = vmatpush1.bf16.msra.mxu0 %v2256
    %2276 = vmatprep.subr.bf16.mxu0 0
    %2277 = vmatpush1.bf16.msra.mxu0 %v2257
    %2278 = vmatprep.subr.bf16.mxu0 0
    %2279 = vmatpush1.bf16.msra.mxu0 %v2258
    %2280 = vmatprep.subr.bf16.mxu0 0
    %2281 = vmatpush1.bf16.msra.mxu0 %v2259
    %2282 = vmatprep.subr.bf16.mxu0 0
    %2283 = vmatpush1.bf16.msra.mxu0 %v2260
    %2284 = vmatprep.subr.bf16.mxu0 0
    %2285 = vmatpush1.bf16.msra.mxu0 %v2261
    %2286 = vmatprep.subr.bf16.mxu0 0
    %2287 = vmatpush1.bf16.msra.mxu0 0
    %2288 = vmatprep.subr.bf16.mxu0 0
    %2289 = vmatpush1.bf16.msra.mxu0 0
    %2290 = vmatprep.subr.bf16.mxu0 0
    %2291 = vmatpush1.bf16.msra.mxu0 0
    %2292 = vmatprep.subr.bf16.mxu0 0
    %2293 = vmatpush1.bf16.msra.mxu0 0
    %2294 = vmatprep.subr.bf16.mxu0 0
    %2295 = vmatpush1.bf16.msra.mxu0 0
    %2296 = vmatprep.subr.bf16.mxu0 0
    %2297 = vmatpush1.bf16.msra.mxu0 0
    %2298 = vmatprep.subr.bf16.mxu0 0
    %2299 = vmatpush1.bf16.msra.mxu0 0
    %2300 = vmatprep.subr.bf16.mxu0 0
    %2301 = vmatpush1.bf16.msra.mxu0 0
    %2302 = vmatprep.mubr.bf16.mxu0 0
    %2303 = vmatmul.mubr.bf16.gmra.mrb[0].mxu0 %v2198
    %v2304 = vpop.f32.mrb[0].mxu0
    %v2305 = vadd.f32 %v2220, %v2304
    %v2306 = vpop.f32.mrb[0].mxu0
    %v2307 = vpop.f32.mrb[0].mxu0
    %v2308 = vpop.f32.mrb[0].mxu0
    %2309 = vdwg.mxu0
    %v2310 = vpack.c.bf16 %v2305, %v2305
    %2311 = vst [vmem:[#allocation11] sm:$0xf] %v2310
    // Predicated region
    $region58: #{tpu_custom_call.1} parent=1 // pred_check
      _
    $region59: #{tpu_custom_call.1} parent=1 // pred_check_branch
      %2313 = sbr.rel (0) target = $region61
    $region60: #{tpu_custom_call.1} parent=1 // pred_region
      %s2315 = ssub.s32 64, 64
      %2316 = vsyncadd [#allocation4], %s2315
      %s2318 = sshll.u32 [#allocation11], 4
      %s2319 = int_to_ptr.vmem [resolvable:$true] %s2318
      %2321 = dma.vmem_to_hbm [thread:$0]  %s2319, 64, %s9, [#allocation4]
    $region61: #{tpu_custom_call.1} parent=1 // pred_fallthru
      _
    // Predicated region
    $region62: #{tpu_custom_call.1} parent=1 // pred_check
      _
    $region63: #{tpu_custom_call.1} parent=1 // pred_check_branch
      %2323 = sbr.rel (0) target = $region65
    $region64: #{tpu_custom_call.1} parent=1 // pred_region
      %2324 = dma.done [#allocation4], 64
    $region65: #{tpu_custom_call.1} parent=1 // pred_fallthru
      _
    %2325 = vsyncpa [#allocation3], 1
    %2326 = vsyncpa [#allocation6], 1
    %2327 = vsyncpa [#allocation9], 1
    %2328 = vsyncpa [#allocation4], 1

</llo_original>
